<compile_context>
chip_gen: v5e
topology: v5e:2x2
jax: 0.10.0
libtpu: 0.0.40
codegen_flags: <defaults>
</compile_context>

<pallas_src>
import functools
import math

import jax
import jax.numpy as jnp
from jax import lax
from jax.experimental import pallas as pl
from jax.experimental.pallas import tpu as pltpu

_INV_SQRT2 = 0.7071067811865476


def _gelu_erf(x):
    # gelu(x) = x * 0.5 * (1 + erf(x / sqrt(2)))  -- exact erf-based BERT gelu
    return x * 0.5 * (1.0 + lax.erf(x * _INV_SQRT2))


def _layernorm(x, gamma, beta, eps=1e-5):
    # BertLayerNorm: normalize over last dim, biased variance, eps=1e-5.
    mean = jnp.mean(x, axis=-1, keepdims=True)
    var = jnp.mean((x - mean) ** 2, axis=-1, keepdims=True)
    return (x - mean) * lax.rsqrt(var + eps) * gamma + beta


def bert_layer_kernel(
    # per grid step (= one batch element x one query tile)
    x_q_ref,      # (1, TQ, H)      f32  residual / LayerNorm input rows
    q3_ref,       # (1, NH, TQ, d)  bf16 pre-scaled head-major query tile
    k3_ref,       # (1, NH, S, d)   bf16 head-major keys   (full sequence)
    v3_ref,       # (1, NH, S, d)   bf16 head-major values (full sequence)
    mask_ref,     # (1, 1, TQ, S)   f32  additive attention mask tile
    # constants (whole-array, single-buffered)
    wo3_ref, bo_ref, ln1_g_ref, ln1_b_ref,
    wi_ref, bi_ref, wout_ref, bout_ref, ln2_g_ref, ln2_b_ref,
    # output
    out_ref,      # (1, TQ, H) f32
    *, num_heads,
):
    x_q = x_q_ref[0]                 # (TQ, H)     f32
    q3 = q3_ref[0]                   # (NH, TQ, d) bf16
    k3 = k3_ref[0]                   # (NH, S, d)  bf16
    v3 = v3_ref[0]                   # (NH, S, d)  bf16
    mask = mask_ref[0, 0]            # (TQ, S)     f32

    # --- multi-head attention: head-major batched einsums, f32 softmax ---
    scores = jnp.einsum('hqd,hkd->hqk', q3, k3,
                        preferred_element_type=jnp.float32)      # (NH, TQ, S)
    scores = scores + mask[None, :, :]
    scores = scores - jnp.max(scores, axis=-1, keepdims=True)
    p = jnp.exp(scores)
    denom = jnp.sum(p, axis=-1, keepdims=True)                   # (NH, TQ, 1)
    p = p.astype(jnp.bfloat16)   # cast early: one (NH,TQ,S) f32 temp stays live
    ctx = jnp.einsum('hqk,hkd->hqd', p, v3,
                     preferred_element_type=jnp.float32)         # (NH, TQ, d)
    # softmax normalization folded into the small context; EUP reciprocal
    ctx = (ctx * pl.reciprocal(denom, approx=True)).astype(jnp.bfloat16)

    # --- BertSelfOutput dense: head-summed contraction straight from the
    # head-major context (no transpose / tile-crossing reshape per step). ---
    q_tile, hidden = x_q.shape
    attn = jnp.zeros((q_tile, hidden), jnp.float32)
    for h in range(num_heads):
        attn = attn + jnp.dot(ctx[h], wo3_ref[h],
                              preferred_element_type=jnp.float32)
    attn = attn + bo_ref[0]
    h1 = _layernorm(attn + x_q, ln1_g_ref[0], ln1_b_ref[0])

    # --- BertIntermediate: dense + exact erf gelu (f32 elementwise) ---
    inter = jnp.dot(h1.astype(jnp.bfloat16), wi_ref[...],
                    preferred_element_type=jnp.float32) + bi_ref[0]
    inter = _gelu_erf(inter)

    # --- BertOutput: dense + residual + LayerNorm ---
    out = jnp.dot(inter.astype(jnp.bfloat16), wout_ref[...],
                  preferred_element_type=jnp.float32) + bout_ref[0]
    out_ref[0] = _layernorm(out + h1, ln2_g_ref[0], ln2_b_ref[0])


def _pick_q_tile(seq_len, target):
    if seq_len <= target:
        return seq_len
    t = target
    while t >= 8:
        if seq_len % t == 0:
            return t
        t //= 2
    return seq_len


def _generation_tiling():
    """q_tile target + scoped-VMEM limit keyed off physical VMEM capacity."""
    try:
        vmem_cap = int(pltpu.get_tpu_info().vmem_capacity_bytes)
    except Exception:
        vmem_cap = 64 * 1024 * 1024          # conservative: assume 64 MiB part
    if vmem_cap <= 64 * 1024 * 1024:         # v7x-class (64 MiB VMEM / core)
        return 128, 48 * 1024 * 1024
    return 256, 96 * 1024 * 1024             # v5e / v6e (128 MiB VMEM)


def bert_layer(hidden_states, attention_mask, params, *, num_heads, q_tile=None):
    B, S, H = hidden_states.shape
    I = params["wi"].shape[1]
    d = H // num_heads
    assert num_heads * d == H

    q_target, vmem_limit = _generation_tiling()
    if q_tile is None:
        q_tile = _pick_q_tile(S, q_target)
    assert S % q_tile == 0, "sequence length must be divisible by q_tile"
    n_q = S // q_tile

    x = hidden_states.astype(jnp.float32)
    mask = attention_mask.astype(jnp.float32)

    bf = lambda name: params[name].astype(jnp.bfloat16)
    pf = lambda name: params[name].astype(jnp.float32)

    # ---- Q/K/V projections hoisted out of the kernel (one XLA matmul each over
    # the whole batch): K/V are computed once instead of once per query tile,
    # Q/K/V are delivered head-major bf16 (MXU-dense attention operands, no
    # in-kernel relayouts), and both grid axes stay "parallel". ----
    x_bf = x.astype(jnp.bfloat16)
    scale = 1.0 / math.sqrt(d)

    def heads(t):                      # (B, S, H) -> (B, NH, S, d)
        return t.reshape(B, S, num_heads, d).transpose(0, 2, 1, 3)

    q3 = heads((jnp.dot(x_bf, bf("wq"), preferred_element_type=jnp.float32)
                + pf("bq")) * scale).astype(jnp.bfloat16)
    k3 = heads(jnp.dot(x_bf, bf("wk"),                      # key: no bias
                       preferred_element_type=jnp.float32)).astype(jnp.bfloat16)
    v3 = heads(jnp.dot(x_bf, bf("wv"), preferred_element_type=jnp.float32)
               + pf("bv")).astype(jnp.bfloat16)
    wo3 = params["wo"].reshape(num_heads, d, H).astype(jnp.bfloat16)

    def const_spec(shape):
        # Whole-array operand, constant across the grid: fetched once and kept
        # in a SINGLE VMEM buffer (never silently double-buffered).
        nd = len(shape)
        return pl.BlockSpec(shape, lambda b, qi, _n=nd: (0,) * _n,
                            pipeline_mode=pl.Buffered(1))

    in_specs = [
        pl.BlockSpec((1, q_tile, H), lambda b, qi: (b, qi, 0)),            # x_q
        pl.BlockSpec((1, num_heads, q_tile, d), lambda b, qi: (b, 0, qi, 0)),  # q3
        pl.BlockSpec((1, num_heads, S, d), lambda b, qi: (b, 0, 0, 0)),    # k3
        pl.BlockSpec((1, num_heads, S, d), lambda b, qi: (b, 0, 0, 0)),    # v3
        pl.BlockSpec((1, 1, q_tile, S), lambda b, qi: (b, 0, qi, 0)),      # mask
        const_spec((num_heads, d, H)),                                     # wo3
        const_spec((1, H)), const_spec((1, H)), const_spec((1, H)),        # bo, ln1_g, ln1_b
        const_spec((H, I)), const_spec((1, I)),                            # wi, bi
        const_spec((I, H)), const_spec((1, H)),                            # wout, bout
        const_spec((1, H)), const_spec((1, H)),                            # ln2_g, ln2_b
    ]

    # Advisory cost estimate (kernel work only) so XLA can overlap the
    # wrapper-side QKV matmuls / casts with the kernel.
    flops = (4 * B * num_heads * S * S * d      # QK^T + PV
             + 2 * B * S * H * H                # attention output projection
             + 4 * B * S * H * I)               # FFN (two dense layers)
    transcendentals = B * num_heads * S * S + B * S * I
    bytes_accessed = (2 * B * S * H * 4                  # x_q in + out (f32)
                      + 3 * B * num_heads * S * d * 2    # q3 / k3 / v3 (bf16)
                      + B * S * S * 4                    # mask (f32)
                      + 2 * (H * H + 2 * H * I))         # resident bf16 weights

    kernel = functools.partial(bert_layer_kernel, num_heads=num_heads)

    return pl.pallas_call(
        kernel,
        out_shape=jax.ShapeDtypeStruct((B, S, H), jnp.float32),
        grid=(B, n_q),
        in_specs=in_specs,
        out_specs=pl.BlockSpec((1, q_tile, H), lambda b, qi: (b, qi, 0)),
        compiler_params=pltpu.CompilerParams(
            dimension_semantics=("parallel", "parallel"),
            vmem_limit_bytes=vmem_limit,
        ),
        cost_estimate=pl.CostEstimate(
            flops=int(flops),
            transcendentals=int(transcendentals),
            bytes_accessed=int(bytes_accessed),
        ),
    )(
        x, q3, k3, v3, mask,
        wo3, pf("bo"), pf("ln1_g"), pf("ln1_b"),
        bf("wi"), pf("bi"), bf("wout"), pf("bout"),
        pf("ln2_g"), pf("ln2_b"),
    )


def bert_layer_reference(x, mask, params, *, num_heads):
    """Pure-JAX f32 reference matching the PyTorch module (eval mode)."""
    B, S, H = x.shape
    d = H // num_heads

    def split(t):
        return t.reshape(B, S, num_heads, d).transpose(0, 2, 1, 3)

    q = split((x @ params["wq"] + params["bq"]) / math.sqrt(d))
    k = split(x @ params["wk"])                      # key: no bias
    v = split(x @ params["wv"] + params["bv"])
    scores = jnp.einsum('bhqd,bhkd->bhqk', q, k) + mask
    p = jax.nn.softmax(scores, axis=-1)
    ctx = jnp.einsum('bhqk,bhkd->bhqd', p, v)
    ctx = ctx.transpose(0, 2, 1, 3).reshape(B, S, H)
    attn = ctx @ params["wo"] + params["bo"]
    h1 = _layernorm(attn + x, params["ln1_g"], params["ln1_b"])
    inter = _gelu_erf(h1 @ params["wi"] + params["bi"])
    out = inter @ params["wout"] + params["bout"]
    return _layernorm(out + h1, params["ln2_g"], params["ln2_b"])


def init_params(key, hidden, intermediate):
    ks = jax.random.split(key, 15)
    w = lambda k, shp: 0.1 * jax.random.normal(k, shp, jnp.float32)
    return {
        "wq":   w(ks[0], (hidden, hidden)),  "bq":   w(ks[1], (1, hidden)),
        "wk":   w(ks[2], (hidden, hidden)),
        "wv":   w(ks[3], (hidden, hidden)),  "bv":   w(ks[4], (1, hidden)),
        "wo":   w(ks[5], (hidden, hidden)),  "bo":   w(ks[6], (1, hidden)),
        "ln1_g": 1.0 + w(ks[7], (1, hidden)), "ln1_b": w(ks[8], (1, hidden)),
        "wi":   w(ks[9], (hidden, intermediate)),
        "bi":   w(ks[10], (1, intermediate)),
        "wout": w(ks[11], (intermediate, hidden)),
        "bout": w(ks[12], (1, hidden)),
        "ln2_g": 1.0 + w(ks[13], (1, hidden)), "ln2_b": w(ks[14], (1, hidden)),
    }


if __name__ == "__main__":
    # TODO(synk): history_states / key-value caches / seg_emb / num_qkv>1 /
    # training-mode dropout paths of the reference forward are not implemented
    # (default eval-mode config path only).
    B, S, H, NH, I = 2, 8, 32, 4, 64

    key = jax.random.PRNGKey(0)
    k_x, k_m, k_p = jax.random.split(key, 3)

    hidden_states = jax.random.normal(k_x, (B, S, H), jnp.float32)
    # additive attention mask: 0 for visible, -10000 for masked positions
    visible = (jax.random.uniform(k_m, (B, 1, S, S)) > 0.2).astype(jnp.float32)
    attention_mask = (1.0 - visible) * -10000.0

    params = init_params(k_p, H, I)

    out = bert_layer(hidden_states, attention_mask, params, num_heads=NH)
    jax.block_until_ready(out)

    ref = bert_layer_reference(hidden_states, attention_mask, params,
                               num_heads=NH)
    err = float(jnp.max(jnp.abs(out - ref)))

    assert out.shape == (B, S, H)
    assert bool(jnp.all(jnp.isfinite(out)))
    assert err < 0.1, f"kernel deviates from f32 reference: max|err|={err:.4f}"
    print("KERNEL_OK")
</pallas_src>

<mosaic_0001>
module attributes {stable_mosaic.version = 11 : i64} {
  func.func @bert_layer_kernel(%arg0: i32, %arg1: i32, %arg2: memref<1x8x32xf32, #tpu.memory_space<vmem>>, %arg3: memref<1x4x8x8xbf16, #tpu.memory_space<vmem>>, %arg4: memref<1x4x8x8xbf16, #tpu.memory_space<vmem>>, %arg5: memref<1x4x8x8xbf16, #tpu.memory_space<vmem>>, %arg6: memref<1x1x8x8xf32, #tpu.memory_space<vmem>>, %arg7: memref<4x8x32xbf16, #tpu.memory_space<vmem>>, %arg8: memref<1x32xf32, #tpu.memory_space<vmem>>, %arg9: memref<1x32xf32, #tpu.memory_space<vmem>>, %arg10: memref<1x32xf32, #tpu.memory_space<vmem>>, %arg11: memref<32x64xbf16, #tpu.memory_space<vmem>>, %arg12: memref<1x64xf32, #tpu.memory_space<vmem>>, %arg13: memref<64x32xbf16, #tpu.memory_space<vmem>>, %arg14: memref<1x32xf32, #tpu.memory_space<vmem>>, %arg15: memref<1x32xf32, #tpu.memory_space<vmem>>, %arg16: memref<1x32xf32, #tpu.memory_space<vmem>>, %arg17: memref<1x8x32xf32, #tpu.memory_space<vmem>>) attributes {dimension_semantics = [#tpu.dimension_semantics<parallel>, #tpu.dimension_semantics<parallel>], iteration_bounds = array<i64: 2, 1>, scalar_prefetch = 0 : i64, scratch_operands = 0 : i64, tpu.core_type = #tpu.core_type<tc>, window_params = [{transform_indices = @transform_0, window_bounds = array<i64: 1, 8, 32>}, {transform_indices = @transform_1, window_bounds = array<i64: 1, 4, 8, 8>}, {transform_indices = @transform_2, window_bounds = array<i64: 1, 4, 8, 8>}, {transform_indices = @transform_3, window_bounds = array<i64: 1, 4, 8, 8>}, {transform_indices = @transform_4, window_bounds = array<i64: 1, 1, 8, 8>}, {pipeline_mode = #tpu.pipeline_mode<synchronous>, transform_indices = @transform_5, window_bounds = array<i64: 4, 8, 32>}, {pipeline_mode = #tpu.pipeline_mode<synchronous>, transform_indices = @transform_6, window_bounds = array<i64: 1, 32>}, {pipeline_mode = #tpu.pipeline_mode<synchronous>, transform_indices = @transform_7, window_bounds = array<i64: 1, 32>}, {pipeline_mode = #tpu.pipeline_mode<synchronous>, transform_indices = @transform_8, window_bounds = array<i64: 1, 32>}, {pipeline_mode = #tpu.pipeline_mode<synchronous>, transform_indices = @transform_9, window_bounds = array<i64: 32, 64>}, {pipeline_mode = #tpu.pipeline_mode<synchronous>, transform_indices = @transform_10, window_bounds = array<i64: 1, 64>}, {pipeline_mode = #tpu.pipeline_mode<synchronous>, transform_indices = @transform_11, window_bounds = array<i64: 64, 32>}, {pipeline_mode = #tpu.pipeline_mode<synchronous>, transform_indices = @transform_12, window_bounds = array<i64: 1, 32>}, {pipeline_mode = #tpu.pipeline_mode<synchronous>, transform_indices = @transform_13, window_bounds = array<i64: 1, 32>}, {pipeline_mode = #tpu.pipeline_mode<synchronous>, transform_indices = @transform_14, window_bounds = array<i64: 1, 32>}, {transform_indices = @transform_15, window_bounds = array<i64: 1, 8, 32>}]} {
    %c0 = arith.constant 0 : index
    %c0_0 = arith.constant 0 : index
    %c0_1 = arith.constant 0 : index
    %0 = vector.load %arg2[%c0, %c0_0, %c0_1] : memref<1x8x32xf32, #tpu.memory_space<vmem>>, vector<1x8x32xf32>
    %1 = vector.shape_cast %0 : vector<1x8x32xf32> to vector<8x32xf32>
    %c0_2 = arith.constant 0 : index
    %c0_3 = arith.constant 0 : index
    %c0_4 = arith.constant 0 : index
    %c0_5 = arith.constant 0 : index
    %2 = vector.load %arg3[%c0_2, %c0_3, %c0_4, %c0_5] : memref<1x4x8x8xbf16, #tpu.memory_space<vmem>>, vector<1x4x8x8xbf16>
    %3 = vector.shape_cast %2 : vector<1x4x8x8xbf16> to vector<4x8x8xbf16>
    %c0_6 = arith.constant 0 : index
    %c0_7 = arith.constant 0 : index
    %c0_8 = arith.constant 0 : index
    %c0_9 = arith.constant 0 : index
    %4 = vector.load %arg4[%c0_6, %c0_7, %c0_8, %c0_9] : memref<1x4x8x8xbf16, #tpu.memory_space<vmem>>, vector<1x4x8x8xbf16>
    %5 = vector.shape_cast %4 : vector<1x4x8x8xbf16> to vector<4x8x8xbf16>
    %c0_10 = arith.constant 0 : index
    %c0_11 = arith.constant 0 : index
    %c0_12 = arith.constant 0 : index
    %c0_13 = arith.constant 0 : index
    %6 = vector.load %arg5[%c0_10, %c0_11, %c0_12, %c0_13] : memref<1x4x8x8xbf16, #tpu.memory_space<vmem>>, vector<1x4x8x8xbf16>
    %7 = vector.shape_cast %6 : vector<1x4x8x8xbf16> to vector<4x8x8xbf16>
    %c0_14 = arith.constant 0 : index
    %c0_15 = arith.constant 0 : index
    %c0_16 = arith.constant 0 : index
    %c0_17 = arith.constant 0 : index
    %8 = vector.load %arg6[%c0_14, %c0_15, %c0_16, %c0_17] : memref<1x1x8x8xf32, #tpu.memory_space<vmem>>, vector<1x1x8x8xf32>
    %9 = vector.shape_cast %8 : vector<1x1x8x8xf32> to vector<8x8xf32>
    "tpu.trace_start"() <{level = 10 : i32, message = "hqd,hkd->hqk"}> : () -> ()
    %cst = arith.constant dense<0.000000e+00> : vector<4x8x8xf32>
    %10 = tpu.matmul %3, %5, %cst {dimension_numbers = #tpu.dot_dimension_numbers<[2], [2], [1], [1], [0, 0, 0, 1, 1, 1], [0], [0]>} : vector<4x8x8xbf16>, vector<4x8x8xbf16>, vector<4x8x8xf32> -> vector<4x8x8xf32>
    "tpu.trace_stop"() : () -> ()
    %11 = vector.shape_cast %9 : vector<8x8xf32> to vector<1x8x8xf32>
    %12 = vector.broadcast %11 : vector<1x8x8xf32> to vector<4x8x8xf32>
    %13 = arith.addf %10, %12 : vector<4x8x8xf32>
    %cst_18 = arith.constant dense<0xFF800000> : vector<4x8xf32>
    %14 = vector.multi_reduction <maximumf>, %13, %cst_18 [2] : vector<4x8x8xf32> to vector<4x8xf32>
    %15 = vector.shape_cast %14 : vector<4x8xf32> to vector<4x8x1xf32>
    %16 = vector.broadcast %15 : vector<4x8x1xf32> to vector<4x8x8xf32>
    %17 = arith.subf %13, %16 : vector<4x8x8xf32>
    %18 = math.exp %17 : vector<4x8x8xf32>
    %cst_19 = arith.constant dense<0.000000e+00> : vector<4x8xf32>
    %19 = vector.multi_reduction <add>, %18, %cst_19 [2] : vector<4x8x8xf32> to vector<4x8xf32>
    %20 = vector.shape_cast %19 : vector<4x8xf32> to vector<4x8x1xf32>
    %21 = arith.truncf %18 : vector<4x8x8xf32> to vector<4x8x8xbf16>
    "tpu.trace_start"() <{level = 10 : i32, message = "hqk,hkd->hqd"}> : () -> ()
    %cst_20 = arith.constant dense<0.000000e+00> : vector<4x8x8xf32>
    %22 = tpu.matmul %21, %7, %cst_20 {dimension_numbers = #tpu.dot_dimension_numbers<[2], [1], [1], [2], [0, 0, 0, 1, 1, 2], [0], [0]>} : vector<4x8x8xbf16>, vector<4x8x8xbf16>, vector<4x8x8xf32> -> vector<4x8x8xf32>
    "tpu.trace_stop"() : () -> ()
    %23 = tpu.reciprocal %20 {approx = true} : vector<4x8x1xf32> -> vector<4x8x1xf32>
    %24 = vector.broadcast %23 : vector<4x8x1xf32> to vector<4x8x8xf32>
    %25 = arith.mulf %22, %24 : vector<4x8x8xf32>
    %26 = arith.truncf %25 : vector<4x8x8xf32> to vector<4x8x8xbf16>
    %cst_21 = arith.constant 0.000000e+00 : f32
    %27 = vector.broadcast %cst_21 : f32 to vector<8x32xf32>
    %28 = vector.extract_strided_slice %26 {offsets = [0, 0, 0], sizes = [1, 8, 8], strides = [1, 1, 1]} : vector<4x8x8xbf16> to vector<1x8x8xbf16>
    %29 = vector.shape_cast %28 : vector<1x8x8xbf16> to vector<8x8xbf16>
    %c0_22 = arith.constant 0 : index
    %c0_23 = arith.constant 0 : index
    %c0_24 = arith.constant 0 : index
    %30 = vector.load %arg7[%c0_22, %c0_23, %c0_24] : memref<4x8x32xbf16, #tpu.memory_space<vmem>>, vector<1x8x32xbf16>
    %31 = vector.shape_cast %30 : vector<1x8x32xbf16> to vector<8x32xbf16>
    %cst_25 = arith.constant dense<0.000000e+00> : vector<8x32xf32>
    %32 = tpu.matmul %29, %31, %cst_25 {dimension_numbers = #tpu.dot_dimension_numbers<[1], [0], [0], [1], [0, 0, 1, 1], [], []>} : vector<8x8xbf16>, vector<8x32xbf16>, vector<8x32xf32> -> vector<8x32xf32>
    %33 = arith.addf %27, %32 : vector<8x32xf32>
    %34 = vector.extract_strided_slice %26 {offsets = [1, 0, 0], sizes = [1, 8, 8], strides = [1, 1, 1]} : vector<4x8x8xbf16> to vector<1x8x8xbf16>
    %35 = vector.shape_cast %34 : vector<1x8x8xbf16> to vector<8x8xbf16>
    %c1 = arith.constant 1 : index
    %c0_26 = arith.constant 0 : index
    %c0_27 = arith.constant 0 : index
    %36 = vector.load %arg7[%c1, %c0_26, %c0_27] : memref<4x8x32xbf16, #tpu.memory_space<vmem>>, vector<1x8x32xbf16>
    %37 = vector.shape_cast %36 : vector<1x8x32xbf16> to vector<8x32xbf16>
    %cst_28 = arith.constant dense<0.000000e+00> : vector<8x32xf32>
    %38 = tpu.matmul %35, %37, %cst_28 {dimension_numbers = #tpu.dot_dimension_numbers<[1], [0], [0], [1], [0, 0, 1, 1], [], []>} : vector<8x8xbf16>, vector<8x32xbf16>, vector<8x32xf32> -> vector<8x32xf32>
    %39 = arith.addf %33, %38 : vector<8x32xf32>
    %40 = vector.extract_strided_slice %26 {offsets = [2, 0, 0], sizes = [1, 8, 8], strides = [1, 1, 1]} : vector<4x8x8xbf16> to vector<1x8x8xbf16>
    %41 = vector.shape_cast %40 : vector<1x8x8xbf16> to vector<8x8xbf16>
    %c2 = arith.constant 2 : index
    %c0_29 = arith.constant 0 : index
    %c0_30 = arith.constant 0 : index
    %42 = vector.load %arg7[%c2, %c0_29, %c0_30] : memref<4x8x32xbf16, #tpu.memory_space<vmem>>, vector<1x8x32xbf16>
    %43 = vector.shape_cast %42 : vector<1x8x32xbf16> to vector<8x32xbf16>
    %cst_31 = arith.constant dense<0.000000e+00> : vector<8x32xf32>
    %44 = tpu.matmul %41, %43, %cst_31 {dimension_numbers = #tpu.dot_dimension_numbers<[1], [0], [0], [1], [0, 0, 1, 1], [], []>} : vector<8x8xbf16>, vector<8x32xbf16>, vector<8x32xf32> -> vector<8x32xf32>
    %45 = arith.addf %39, %44 : vector<8x32xf32>
    %46 = vector.extract_strided_slice %26 {offsets = [3, 0, 0], sizes = [1, 8, 8], strides = [1, 1, 1]} : vector<4x8x8xbf16> to vector<1x8x8xbf16>
    %47 = vector.shape_cast %46 : vector<1x8x8xbf16> to vector<8x8xbf16>
    %c3 = arith.constant 3 : index
    %c0_32 = arith.constant 0 : index
    %c0_33 = arith.constant 0 : index
    %48 = vector.load %arg7[%c3, %c0_32, %c0_33] : memref<4x8x32xbf16, #tpu.memory_space<vmem>>, vector<1x8x32xbf16>
    %49 = vector.shape_cast %48 : vector<1x8x32xbf16> to vector<8x32xbf16>
    %cst_34 = arith.constant dense<0.000000e+00> : vector<8x32xf32>
    %50 = tpu.matmul %47, %49, %cst_34 {dimension_numbers = #tpu.dot_dimension_numbers<[1], [0], [0], [1], [0, 0, 1, 1], [], []>} : vector<8x8xbf16>, vector<8x32xbf16>, vector<8x32xf32> -> vector<8x32xf32>
    %51 = arith.addf %45, %50 : vector<8x32xf32>
    %c0_35 = arith.constant 0 : index
    %c0_36 = arith.constant 0 : index
    %52 = vector.load %arg8[%c0_35, %c0_36] : memref<1x32xf32, #tpu.memory_space<vmem>>, vector<1x32xf32>
    %53 = vector.shape_cast %52 : vector<1x32xf32> to vector<32xf32>
    %54 = vector.shape_cast %53 : vector<32xf32> to vector<1x32xf32>
    %55 = vector.broadcast %54 : vector<1x32xf32> to vector<8x32xf32>
    %56 = arith.addf %51, %55 : vector<8x32xf32>
    %57 = arith.addf %56, %1 : vector<8x32xf32>
    %c0_37 = arith.constant 0 : index
    %c0_38 = arith.constant 0 : index
    %58 = vector.load %arg9[%c0_37, %c0_38] : memref<1x32xf32, #tpu.memory_space<vmem>>, vector<1x32xf32>
    %59 = vector.shape_cast %58 : vector<1x32xf32> to vector<32xf32>
    %c0_39 = arith.constant 0 : index
    %c0_40 = arith.constant 0 : index
    %60 = vector.load %arg10[%c0_39, %c0_40] : memref<1x32xf32, #tpu.memory_space<vmem>>, vector<1x32xf32>
    %61 = vector.shape_cast %60 : vector<1x32xf32> to vector<32xf32>
    %cst_41 = arith.constant dense<0.000000e+00> : vector<8xf32>
    %62 = vector.multi_reduction <add>, %57, %cst_41 [1] : vector<8x32xf32> to vector<8xf32>
    %63 = vector.shape_cast %62 : vector<8xf32> to vector<8x1xf32>
    %cst_42 = arith.constant 3.200000e+01 : f32
    %64 = vector.broadcast %cst_42 : f32 to vector<8x1xf32>
    %65 = arith.divf %63, %64 : vector<8x1xf32>
    %66 = vector.broadcast %65 : vector<8x1xf32> to vector<8x32xf32>
    %67 = arith.subf %57, %66 : vector<8x32xf32>
    %68 = arith.mulf %67, %67 : vector<8x32xf32>
    %cst_43 = arith.constant dense<0.000000e+00> : vector<8xf32>
    %69 = vector.multi_reduction <add>, %68, %cst_43 [1] : vector<8x32xf32> to vector<8xf32>
    %70 = vector.shape_cast %69 : vector<8xf32> to vector<8x1xf32>
    %cst_44 = arith.constant 3.200000e+01 : f32
    %71 = vector.broadcast %cst_44 : f32 to vector<8x1xf32>
    %72 = arith.divf %70, %71 : vector<8x1xf32>
    %73 = vector.broadcast %65 : vector<8x1xf32> to vector<8x32xf32>
    %74 = arith.subf %57, %73 : vector<8x32xf32>
    %cst_45 = arith.constant 9.99999974E-6 : f32
    %75 = vector.broadcast %cst_45 : f32 to vector<8x1xf32>
    %76 = arith.addf %72, %75 : vector<8x1xf32>
    %77 = math.rsqrt %76 : vector<8x1xf32>
    %78 = vector.broadcast %77 : vector<8x1xf32> to vector<8x32xf32>
    %79 = arith.mulf %74, %78 : vector<8x32xf32>
    %80 = vector.shape_cast %59 : vector<32xf32> to vector<1x32xf32>
    %81 = vector.broadcast %80 : vector<1x32xf32> to vector<8x32xf32>
    %82 = arith.mulf %79, %81 : vector<8x32xf32>
    %83 = vector.shape_cast %61 : vector<32xf32> to vector<1x32xf32>
    %84 = vector.broadcast %83 : vector<1x32xf32> to vector<8x32xf32>
    %85 = arith.addf %82, %84 : vector<8x32xf32>
    %86 = arith.truncf %85 : vector<8x32xf32> to vector<8x32xbf16>
    %c0_46 = arith.constant 0 : index
    %c0_47 = arith.constant 0 : index
    %87 = vector.load %arg11[%c0_46, %c0_47] : memref<32x64xbf16, #tpu.memory_space<vmem>>, vector<32x64xbf16>
    %cst_48 = arith.constant dense<0.000000e+00> : vector<8x64xf32>
    %88 = tpu.matmul %86, %87, %cst_48 {dimension_numbers = #tpu.dot_dimension_numbers<[1], [0], [0], [1], [0, 0, 1, 1], [], []>} : vector<8x32xbf16>, vector<32x64xbf16>, vector<8x64xf32> -> vector<8x64xf32>
    %c0_49 = arith.constant 0 : index
    %c0_50 = arith.constant 0 : index
    %89 = vector.load %arg12[%c0_49, %c0_50] : memref<1x64xf32, #tpu.memory_space<vmem>>, vector<1x64xf32>
    %90 = vector.shape_cast %89 : vector<1x64xf32> to vector<64xf32>
    %91 = vector.shape_cast %90 : vector<64xf32> to vector<1x64xf32>
    %92 = vector.broadcast %91 : vector<1x64xf32> to vector<8x64xf32>
    %93 = arith.addf %88, %92 : vector<8x64xf32>
    %cst_51 = arith.constant 5.000000e-01 : f32
    %94 = vector.broadcast %cst_51 : f32 to vector<8x64xf32>
    %95 = arith.mulf %93, %94 : vector<8x64xf32>
    %cst_52 = arith.constant 0.707106769 : f32
    %96 = vector.broadcast %cst_52 : f32 to vector<8x64xf32>
    %97 = arith.mulf %93, %96 : vector<8x64xf32>
    %98 = math.erf %97 : vector<8x64xf32>
    %cst_53 = arith.constant 1.000000e+00 : f32
    %99 = vector.broadcast %cst_53 : f32 to vector<8x64xf32>
    %100 = arith.addf %99, %98 : vector<8x64xf32>
    %101 = arith.mulf %95, %100 : vector<8x64xf32>
    %102 = arith.truncf %101 : vector<8x64xf32> to vector<8x64xbf16>
    %c0_54 = arith.constant 0 : index
    %c0_55 = arith.constant 0 : index
    %103 = vector.load %arg13[%c0_54, %c0_55] : memref<64x32xbf16, #tpu.memory_space<vmem>>, vector<64x32xbf16>
    %cst_56 = arith.constant dense<0.000000e+00> : vector<8x32xf32>
    %104 = tpu.matmul %102, %103, %cst_56 {dimension_numbers = #tpu.dot_dimension_numbers<[1], [0], [0], [1], [0, 0, 1, 1], [], []>} : vector<8x64xbf16>, vector<64x32xbf16>, vector<8x32xf32> -> vector<8x32xf32>
    %c0_57 = arith.constant 0 : index
    %c0_58 = arith.constant 0 : index
    %105 = vector.load %arg14[%c0_57, %c0_58] : memref<1x32xf32, #tpu.memory_space<vmem>>, vector<1x32xf32>
    %106 = vector.shape_cast %105 : vector<1x32xf32> to vector<32xf32>
    %107 = vector.shape_cast %106 : vector<32xf32> to vector<1x32xf32>
    %108 = vector.broadcast %107 : vector<1x32xf32> to vector<8x32xf32>
    %109 = arith.addf %104, %108 : vector<8x32xf32>
    %110 = arith.addf %109, %85 : vector<8x32xf32>
    %c0_59 = arith.constant 0 : index
    %c0_60 = arith.constant 0 : index
    %111 = vector.load %arg15[%c0_59, %c0_60] : memref<1x32xf32, #tpu.memory_space<vmem>>, vector<1x32xf32>
    %112 = vector.shape_cast %111 : vector<1x32xf32> to vector<32xf32>
    %c0_61 = arith.constant 0 : index
    %c0_62 = arith.constant 0 : index
    %113 = vector.load %arg16[%c0_61, %c0_62] : memref<1x32xf32, #tpu.memory_space<vmem>>, vector<1x32xf32>
    %114 = vector.shape_cast %113 : vector<1x32xf32> to vector<32xf32>
    %cst_63 = arith.constant dense<0.000000e+00> : vector<8xf32>
    %115 = vector.multi_reduction <add>, %110, %cst_63 [1] : vector<8x32xf32> to vector<8xf32>
    %116 = vector.shape_cast %115 : vector<8xf32> to vector<8x1xf32>
    %cst_64 = arith.constant 3.200000e+01 : f32
    %117 = vector.broadcast %cst_64 : f32 to vector<8x1xf32>
    %118 = arith.divf %116, %117 : vector<8x1xf32>
    %119 = vector.broadcast %118 : vector<8x1xf32> to vector<8x32xf32>
    %120 = arith.subf %110, %119 : vector<8x32xf32>
    %121 = arith.mulf %120, %120 : vector<8x32xf32>
    %cst_65 = arith.constant dense<0.000000e+00> : vector<8xf32>
    %122 = vector.multi_reduction <add>, %121, %cst_65 [1] : vector<8x32xf32> to vector<8xf32>
    %123 = vector.shape_cast %122 : vector<8xf32> to vector<8x1xf32>
    %cst_66 = arith.constant 3.200000e+01 : f32
    %124 = vector.broadcast %cst_66 : f32 to vector<8x1xf32>
    %125 = arith.divf %123, %124 : vector<8x1xf32>
    %126 = vector.broadcast %118 : vector<8x1xf32> to vector<8x32xf32>
    %127 = arith.subf %110, %126 : vector<8x32xf32>
    %cst_67 = arith.constant 9.99999974E-6 : f32
    %128 = vector.broadcast %cst_67 : f32 to vector<8x1xf32>
    %129 = arith.addf %125, %128 : vector<8x1xf32>
    %130 = math.rsqrt %129 : vector<8x1xf32>
    %131 = vector.broadcast %130 : vector<8x1xf32> to vector<8x32xf32>
    %132 = arith.mulf %127, %131 : vector<8x32xf32>
    %133 = vector.shape_cast %112 : vector<32xf32> to vector<1x32xf32>
    %134 = vector.broadcast %133 : vector<1x32xf32> to vector<8x32xf32>
    %135 = arith.mulf %132, %134 : vector<8x32xf32>
    %136 = vector.shape_cast %114 : vector<32xf32> to vector<1x32xf32>
    %137 = vector.broadcast %136 : vector<1x32xf32> to vector<8x32xf32>
    %138 = arith.addf %135, %137 : vector<8x32xf32>
    %c0_68 = arith.constant 0 : index
    %c0_69 = arith.constant 0 : index
    %c0_70 = arith.constant 0 : index
    %139 = vector.load %arg17[%c0_68, %c0_69, %c0_70] : memref<1x8x32xf32, #tpu.memory_space<vmem>>, vector<1x8x32xf32>
    %140 = vector.shape_cast %139 : vector<1x8x32xf32> to vector<8x32xf32>
    %141 = vector.shape_cast %138 : vector<8x32xf32> to vector<1x8x32xf32>
    tpu.vector_store %arg17[%c0_68, %c0_69, %c0_70], %141 {strides = array<i32>} : memref<1x8x32xf32, #tpu.memory_space<vmem>>, vector<1x8x32xf32>,
    return
  }
  func.func @transform_0(%arg0: i32, %arg1: i32) -> (i32, i32, i32) {
    %c0_i32 = arith.constant 0 : i32
    %c0_i32_0 = arith.constant 0 : i32
    return %arg0, %arg1, %c0_i32 : i32, i32, i32
  }
  func.func @transform_1(%arg0: i32, %arg1: i32) -> (i32, i32, i32, i32) {
    %c0_i32 = arith.constant 0 : i32
    %c0_i32_0 = arith.constant 0 : i32
    %c0_i32_1 = arith.constant 0 : i32
    return %arg0, %c0_i32, %arg1, %c0_i32_0 : i32, i32, i32, i32
  }
  func.func @transform_2(%arg0: i32, %arg1: i32) -> (i32, i32, i32, i32) {
    %c0_i32 = arith.constant 0 : i32
    %c0_i32_0 = arith.constant 0 : i32
    %c0_i32_1 = arith.constant 0 : i32
    %c0_i32_2 = arith.constant 0 : i32
    return %arg0, %c0_i32, %c0_i32_0, %c0_i32_1 : i32, i32, i32, i32
  }
  func.func @transform_3(%arg0: i32, %arg1: i32) -> (i32, i32, i32, i32) {
    %c0_i32 = arith.constant 0 : i32
    %c0_i32_0 = arith.constant 0 : i32
    %c0_i32_1 = arith.constant 0 : i32
    %c0_i32_2 = arith.constant 0 : i32
    return %arg0, %c0_i32, %c0_i32_0, %c0_i32_1 : i32, i32, i32, i32
  }
  func.func @transform_4(%arg0: i32, %arg1: i32) -> (i32, i32, i32, i32) {
    %c0_i32 = arith.constant 0 : i32
    %c0_i32_0 = arith.constant 0 : i32
    %c0_i32_1 = arith.constant 0 : i32
    return %arg0, %c0_i32, %arg1, %c0_i32_0 : i32, i32, i32, i32
  }
  func.func @transform_5(%arg0: i32, %arg1: i32) -> (i32, i32, i32) {
    %c0_i32 = arith.constant 0 : i32
    %c0_i32_0 = arith.constant 0 : i32
    %c0_i32_1 = arith.constant 0 : i32
    %c0_i32_2 = arith.constant 0 : i32
    return %c0_i32, %c0_i32_0, %c0_i32_1 : i32, i32, i32
  }
  func.func @transform_6(%arg0: i32, %arg1: i32) -> (i32, i32) {
    %c0_i32 = arith.constant 0 : i32
    %c0_i32_0 = arith.constant 0 : i32
    %c0_i32_1 = arith.constant 0 : i32
    return %c0_i32, %c0_i32_0 : i32, i32
  }
  func.func @transform_7(%arg0: i32, %arg1: i32) -> (i32, i32) {
    %c0_i32 = arith.constant 0 : i32
    %c0_i32_0 = arith.constant 0 : i32
    %c0_i32_1 = arith.constant 0 : i32
    return %c0_i32, %c0_i32_0 : i32, i32
  }
  func.func @transform_8(%arg0: i32, %arg1: i32) -> (i32, i32) {
    %c0_i32 = arith.constant 0 : i32
    %c0_i32_0 = arith.constant 0 : i32
    %c0_i32_1 = arith.constant 0 : i32
    return %c0_i32, %c0_i32_0 : i32, i32
  }
  func.func @transform_9(%arg0: i32, %arg1: i32) -> (i32, i32) {
    %c0_i32 = arith.constant 0 : i32
    %c0_i32_0 = arith.constant 0 : i32
    %c0_i32_1 = arith.constant 0 : i32
    return %c0_i32, %c0_i32_0 : i32, i32
  }
  func.func @transform_10(%arg0: i32, %arg1: i32) -> (i32, i32) {
    %c0_i32 = arith.constant 0 : i32
    %c0_i32_0 = arith.constant 0 : i32
    %c0_i32_1 = arith.constant 0 : i32
    return %c0_i32, %c0_i32_0 : i32, i32
  }
  func.func @transform_11(%arg0: i32, %arg1: i32) -> (i32, i32) {
    %c0_i32 = arith.constant 0 : i32
    %c0_i32_0 = arith.constant 0 : i32
    %c0_i32_1 = arith.constant 0 : i32
    return %c0_i32, %c0_i32_0 : i32, i32
  }
  func.func @transform_12(%arg0: i32, %arg1: i32) -> (i32, i32) {
    %c0_i32 = arith.constant 0 : i32
    %c0_i32_0 = arith.constant 0 : i32
    %c0_i32_1 = arith.constant 0 : i32
    return %c0_i32, %c0_i32_0 : i32, i32
  }
  func.func @transform_13(%arg0: i32, %arg1: i32) -> (i32, i32) {
    %c0_i32 = arith.constant 0 : i32
    %c0_i32_0 = arith.constant 0 : i32
    %c0_i32_1 = arith.constant 0 : i32
    return %c0_i32, %c0_i32_0 : i32, i32
  }
  func.func @transform_14(%arg0: i32, %arg1: i32) -> (i32, i32) {
    %c0_i32 = arith.constant 0 : i32
    %c0_i32_0 = arith.constant 0 : i32
    %c0_i32_1 = arith.constant 0 : i32
    return %c0_i32, %c0_i32_0 : i32, i32
  }
  func.func @transform_15(%arg0: i32, %arg1: i32) -> (i32, i32, i32) {
    %c0_i32 = arith.constant 0 : i32
    %c0_i32_0 = arith.constant 0 : i32
    return %arg0, %arg1, %c0_i32 : i32, i32, i32
  }
}

</mosaic_0001>

<llo_original>
// kernel: tpu_custom_call.1
$region0: #{tpu_custom_call.1}
  #allocation0 [shape = 'u32[]', space=smem, size = 0x4, offset = 0x4, fixed_abs, tag = 'smem constant byte address 0x4 - core index']
  #allocation1 [shape = 'u32[72,128]{1,0:T(1,128)}', space=vmem, size = 0x9000, scoped, tag = 'internal scratch']
  %s0 = inlined_call_operand.vmem [shape: f32[2,8,32], index: 0, kind: input, shape index: {}]
  %s1 = inlined_call_operand.vmem [shape: bf16[2,4,8,8], index: 1, kind: input, shape index: {}]
  %s2 = inlined_call_operand.hbm [shape: bf16[2,4,8,8], index: 2, kind: input, shape index: {}]
  %s3 = inlined_call_operand.hbm [shape: bf16[2,4,8,8], index: 3, kind: input, shape index: {}]
  %s4 = inlined_call_operand.hbm [shape: f32[2,1,8,8], index: 4, kind: input, shape index: {}]
  %s5 = inlined_call_operand.hbm [shape: bf16[4,8,32], index: 5, kind: input, shape index: {}]
  %s6 = inlined_call_operand.vmem [shape: f32[1,32], index: 6, kind: input, shape index: {}]
  %s7 = inlined_call_operand.vmem [shape: f32[1,32], index: 7, kind: input, shape index: {}]
  %s8 = inlined_call_operand.vmem [shape: f32[1,32], index: 8, kind: input, shape index: {}]
  %s9 = inlined_call_operand.hbm [shape: bf16[32,64], index: 9, kind: input, shape index: {}]
  %s10 = inlined_call_operand.vmem [shape: f32[1,64], index: 10, kind: input, shape index: {}]
  %s11 = inlined_call_operand.vmem [shape: bf16[64,32], index: 11, kind: input, shape index: {}]
  %s12 = inlined_call_operand.vmem [shape: f32[1,32], index: 12, kind: input, shape index: {}]
  %s13 = inlined_call_operand.vmem [shape: f32[1,32], index: 13, kind: input, shape index: {}]
  %s14 = inlined_call_operand.vmem [shape: f32[1,32], index: 14, kind: input, shape index: {}]
  %s15 = inlined_call_operand.hbm [shape: f32[2,8,32], index: 15, kind: output, shape index: {}]
  %s16 = sld [smem:[#allocation0]]
  $region113: #{tpu_custom_call.1} parent=0
    _
  %s18 = ssub.s32 1, %s16
  %s19 = scalar_select 0, %s18, %s16
  $region1: #{tpu_custom_call.1} parent=0
    #allocation2 [shape = 'u8[16384]{0}', space=vmem, size = 0x4000, scoped, tag = 'input window, operand 2']
    #allocation3 [shape = 's32[2]{0}', space=sflag, size = 0x8, scoped, tag = 'scoped memory for tpu_custom_call.1']
    #allocation4 [shape = 's32[2]{0}', space=sflag, size = 0x8, scoped, tag = 'scoped memory for tpu_custom_call.1']
    #allocation5 [shape = 'u8[16384]{0}', space=vmem, size = 0x4000, scoped, tag = 'input window, operand 3']
    #allocation6 [shape = 's32[2]{0}', space=sflag, size = 0x8, scoped, tag = 'scoped memory for tpu_custom_call.1']
    #allocation7 [shape = 'u8[8192]{0}', space=vmem, size = 0x2000, scoped, tag = 'input window, operand 4']
    #allocation8 [shape = 'u8[8192]{0}', space=vmem, size = 0x2000, scoped, tag = 'input window, operand 5, single buffered']
    #allocation9 [shape = 's32[1]{0}', space=sflag, size = 0x4, scoped, tag = 'scoped memory for tpu_custom_call.1']
    #allocation10 [shape = 'u8[8192]{0}', space=vmem, size = 0x2000, scoped, tag = 'input window, operand 9, single buffered']
    #allocation11 [shape = 'u8[8192]{0}', space=vmem, size = 0x2000, scoped, tag = 'output window, operand 0']
    %20 = vsyncpa [#allocation3], 0
    %s21 = scalar_lea.sflag [#allocation3], 1
    %22 = vsyncpa %s21, 0
    %23 = vsyncpa [#allocation6], 0
    %s24 = scalar_lea.sflag [#allocation6], 1
    %25 = vsyncpa %s24, 0
    %26 = vsyncpa [#allocation9], 0
    %27 = vsyncpa [#allocation4], 0
    %s28 = scalar_lea.sflag [#allocation4], 1
    %29 = vsyncpa %s28, 0
    loop: start=0, step=1, limit=4
    $region2: #{tpu_custom_call.1} parent=1 // loop_pre_header
      _
    $region3: #{tpu_custom_call.1} parent=1 // loop_header
      %s31 = sphi 0, %s35
      %p32 = scmp.ge.s32.totalorder %s31, 4
      %s38 = sphi 0, %s50
      %s39 = sphi 0, %s46
      %s40 = sphi 0, %s38
      %s41 = sphi 0, %s39
      %s42 = sphi 0, %s40
      %s43 = sphi 0, %s41
      %s55 = sphi 0, %s57
      %s58 = sphi 0, %s55
      %s59 = sphi 0, %s58
      %s75 = sphi 0, %s59
      %s83 = sphi 0, %s85
      %s86 = sphi 0, %s83
      %s87 = sphi 0, %s86
      %s103 = sphi 0, %s87
      %s109 = sphi 0, %s111
      %s112 = sphi 0, %s109
      %s113 = sphi 0, %s112
      %s129 = sphi 0, %s113
      %s135 = sphi 0, %s137
      %s138 = sphi 0, %s135
      %s139 = sphi 0, %s138
      %s155 = sphi 0, %s139
      %s163 = sphi 0, %s165
      %s166 = sphi 0, %s163
      %s167 = sphi 0, %s166
      %s183 = sphi 0, %s167
      %s187 = sphi 0, %s187
      %s189 = sphi 0, %s187
      %s190 = sphi 0, %s189
      %s204 = sphi 0, %s190
      %s208 = sphi 0, %s208
      %s210 = sphi 0, %s208
      %s211 = sphi 0, %s210
      %s225 = sphi 0, %s211
      %s229 = sphi 0, %s229
      %s231 = sphi 0, %s229
      %s232 = sphi 0, %s231
      %s246 = sphi 0, %s232
      %s250 = sphi 0, %s250
      %s252 = sphi 0, %s250
      %s253 = sphi 0, %s252
      %s267 = sphi 0, %s253
      %s271 = sphi 0, %s271
      %s273 = sphi 0, %s271
      %s274 = sphi 0, %s273
      %s288 = sphi 0, %s274
      %s292 = sphi 0, %s292
      %s294 = sphi 0, %s292
      %s295 = sphi 0, %s294
      %s309 = sphi 0, %s295
      %s313 = sphi 0, %s313
      %s315 = sphi 0, %s313
      %s316 = sphi 0, %s315
      %s330 = sphi 0, %s316
      %s334 = sphi 0, %s334
      %s336 = sphi 0, %s334
      %s337 = sphi 0, %s336
      %s351 = sphi 0, %s337
      %s355 = sphi 0, %s355
      %s357 = sphi 0, %s355
      %s358 = sphi 0, %s357
      %s372 = sphi 0, %s358
      %s376 = sphi 0, %s376
      %s378 = sphi 0, %s376
      %s379 = sphi 0, %s378
      %s393 = sphi 0, %s379
      %s401 = sphi 0, %s403
      %s404 = sphi 0, %s401
      %s405 = sphi 0, %s404
      %s421 = sphi 0, %s405
    $region4: #{tpu_custom_call.1} parent=1 // loop_header_branch
      %34 = sbr.rel (%p32) target = $region8
    $region5: #{tpu_custom_call.1} parent=1 // loop_body
      %s36 = ssub.s32 %s31, 1
      %s37 = ssub.s32 %s31, 2
      %s44 = sadd.s32 1, %s39
      %p45 = scmp.ge.s32.totalorder %s44, 1
      %s46 = scalar_select %p45, 0, %s44
      %s47 = sadd.s32 1, %s38
      %s48 = scalar_select %p45, %s47, %s38
      %p49 = scmp.ge.s32.totalorder %s48, 2
      %s50 = scalar_select %p49, 0, %s48
      %s51 = ssub.s32 %s38, %s50
      %s52 = ssub.s32 %s39, %s46
      %s53 = sor.u32 %s51, %s52
      %p54 = scmp.eq.s32.totalorder %s53, 0
      %s56 = sadd.s32 %s55, 1
      %s57 = scalar_select %p54, %s55, %s56
      %p60 = pneg %p54
      %p61 = scmp.eq.s32.totalorder %s31, 1
      %p62 = por %p60, %p61
      %p63 = scmp.ne.s32.totalorder %s55, %s58
      %p64 = scmp.eq.s32.totalorder %s31, 0
      %p65 = por %p63, %p64
      %p66 = scmp.ne.s32.totalorder %s55, %s58
      %p67 = scmp.eq.s32.totalorder %s36, 1
      %p68 = por %p66, %p67
      %p69 = scmp.ne.s32.totalorder %s58, %s59
      %p70 = scmp.eq.s32.totalorder %s36, 0
      %p71 = por %p69, %p70
      %p72 = scmp.ne.s32.totalorder %s58, %s59
      %p73 = scmp.eq.s32.totalorder %s37, 1
      %p74 = por %p72, %p73
      %p76 = scmp.ne.s32.totalorder %s59, %s75
      %p77 = scmp.eq.s32.totalorder %s37, 0
      %p78 = por %p76, %p77
      %s79 = ssub.s32 %s38, %s50
      %s80 = ssub.s32 %s39, %s46
      %s81 = sor.u32 %s79, %s80
      %p82 = scmp.eq.s32.totalorder %s81, 0
      %s84 = sadd.s32 %s83, 1
      %s85 = scalar_select %p82, %s83, %s84
      %p88 = pneg %p82
      %p89 = scmp.eq.s32.totalorder %s31, 1
      %p90 = por %p88, %p89
      %p91 = scmp.ne.s32.totalorder %s83, %s86
      %p92 = scmp.eq.s32.totalorder %s31, 0
      %p93 = por %p91, %p92
      %p94 = scmp.ne.s32.totalorder %s83, %s86
      %p95 = scmp.eq.s32.totalorder %s36, 1
      %p96 = por %p94, %p95
      %p97 = scmp.ne.s32.totalorder %s86, %s87
      %p98 = scmp.eq.s32.totalorder %s36, 0
      %p99 = por %p97, %p98
      %p100 = scmp.ne.s32.totalorder %s86, %s87
      %p101 = scmp.eq.s32.totalorder %s37, 1
      %p102 = por %p100, %p101
      %p104 = scmp.ne.s32.totalorder %s87, %s103
      %p105 = scmp.eq.s32.totalorder %s37, 0
      %p106 = por %p104, %p105
      %s107 = ssub.s32 %s38, %s50
      %p108 = scmp.eq.s32.totalorder %s107, 0
      %s110 = sadd.s32 %s109, 1
      %s111 = scalar_select %p108, %s109, %s110
      %p114 = pneg %p108
      %p115 = scmp.eq.s32.totalorder %s31, 1
      %p116 = por %p114, %p115
      %p117 = scmp.ne.s32.totalorder %s109, %s112
      %p118 = scmp.eq.s32.totalorder %s31, 0
      %p119 = por %p117, %p118
      %p120 = scmp.ne.s32.totalorder %s109, %s112
      %p121 = scmp.eq.s32.totalorder %s36, 1
      %p122 = por %p120, %p121
      %p123 = scmp.ne.s32.totalorder %s112, %s113
      %p124 = scmp.eq.s32.totalorder %s36, 0
      %p125 = por %p123, %p124
      %p126 = scmp.ne.s32.totalorder %s112, %s113
      %p127 = scmp.eq.s32.totalorder %s37, 1
      %p128 = por %p126, %p127
      %p130 = scmp.ne.s32.totalorder %s113, %s129
      %p131 = scmp.eq.s32.totalorder %s37, 0
      %p132 = por %p130, %p131
      %s133 = ssub.s32 %s38, %s50
      %p134 = scmp.eq.s32.totalorder %s133, 0
      %s136 = sadd.s32 %s135, 1
      %s137 = scalar_select %p134, %s135, %s136
      %p140 = pneg %p134
      %p141 = scmp.eq.s32.totalorder %s31, 1
      %p142 = por %p140, %p141
      %p143 = scmp.ne.s32.totalorder %s135, %s138
      %p144 = scmp.eq.s32.totalorder %s31, 0
      %p145 = por %p143, %p144
      %p146 = scmp.ne.s32.totalorder %s135, %s138
      %p147 = scmp.eq.s32.totalorder %s36, 1
      %p148 = por %p146, %p147
      %p149 = scmp.ne.s32.totalorder %s138, %s139
      %p150 = scmp.eq.s32.totalorder %s36, 0
      %p151 = por %p149, %p150
      %p152 = scmp.ne.s32.totalorder %s138, %s139
      %p153 = scmp.eq.s32.totalorder %s37, 1
      %p154 = por %p152, %p153
      %p156 = scmp.ne.s32.totalorder %s139, %s155
      %p157 = scmp.eq.s32.totalorder %s37, 0
      %p158 = por %p156, %p157
      %s159 = ssub.s32 %s38, %s50
      %s160 = ssub.s32 %s39, %s46
      %s161 = sor.u32 %s159, %s160
      %p162 = scmp.eq.s32.totalorder %s161, 0
      %s164 = sadd.s32 %s163, 1
      %s165 = scalar_select %p162, %s163, %s164
      %p168 = pneg %p162
      %p169 = scmp.eq.s32.totalorder %s31, 1
      %p170 = por %p168, %p169
      %p171 = scmp.ne.s32.totalorder %s163, %s166
      %p172 = scmp.eq.s32.totalorder %s31, 0
      %p173 = por %p171, %p172
      %p174 = scmp.ne.s32.totalorder %s163, %s166
      %p175 = scmp.eq.s32.totalorder %s36, 1
      %p176 = por %p174, %p175
      %p177 = scmp.ne.s32.totalorder %s166, %s167
      %p178 = scmp.eq.s32.totalorder %s36, 0
      %p179 = por %p177, %p178
      %p180 = scmp.ne.s32.totalorder %s166, %s167
      %p181 = scmp.eq.s32.totalorder %s37, 1
      %p182 = por %p180, %p181
      %p184 = scmp.ne.s32.totalorder %s167, %s183
      %p185 = scmp.eq.s32.totalorder %s37, 0
      %p186 = por %p184, %p185
      %s188 = sadd.s32 %s187, 1
      %p191 = scmp.eq.s32.totalorder %s31, 1
      %p192 = scmp.ne.s32.totalorder %s187, %s189
      %p193 = scmp.eq.s32.totalorder %s31, 0
      %p194 = por %p192, %p193
      %p195 = scmp.ne.s32.totalorder %s187, %s189
      %p196 = scmp.eq.s32.totalorder %s36, 1
      %p197 = por %p195, %p196
      %p198 = scmp.ne.s32.totalorder %s189, %s190
      %p199 = scmp.eq.s32.totalorder %s36, 0
      %p200 = por %p198, %p199
      %p201 = scmp.ne.s32.totalorder %s189, %s190
      %p202 = scmp.eq.s32.totalorder %s37, 1
      %p203 = por %p201, %p202
      %p205 = scmp.ne.s32.totalorder %s190, %s204
      %p206 = scmp.eq.s32.totalorder %s37, 0
      %p207 = por %p205, %p206
      %s209 = sadd.s32 %s208, 1
      %p212 = scmp.eq.s32.totalorder %s31, 1
      %p213 = scmp.ne.s32.totalorder %s208, %s210
      %p214 = scmp.eq.s32.totalorder %s31, 0
      %p215 = por %p213, %p214
      %p216 = scmp.ne.s32.totalorder %s208, %s210
      %p217 = scmp.eq.s32.totalorder %s36, 1
      %p218 = por %p216, %p217
      %p219 = scmp.ne.s32.totalorder %s210, %s211
      %p220 = scmp.eq.s32.totalorder %s36, 0
      %p221 = por %p219, %p220
      %p222 = scmp.ne.s32.totalorder %s210, %s211
      %p223 = scmp.eq.s32.totalorder %s37, 1
      %p224 = por %p222, %p223
      %p226 = scmp.ne.s32.totalorder %s211, %s225
      %p227 = scmp.eq.s32.totalorder %s37, 0
      %p228 = por %p226, %p227
      %s230 = sadd.s32 %s229, 1
      %p233 = scmp.eq.s32.totalorder %s31, 1
      %p234 = scmp.ne.s32.totalorder %s229, %s231
      %p235 = scmp.eq.s32.totalorder %s31, 0
      %p236 = por %p234, %p235
      %p237 = scmp.ne.s32.totalorder %s229, %s231
      %p238 = scmp.eq.s32.totalorder %s36, 1
      %p239 = por %p237, %p238
      %p240 = scmp.ne.s32.totalorder %s231, %s232
      %p241 = scmp.eq.s32.totalorder %s36, 0
      %p242 = por %p240, %p241
      %p243 = scmp.ne.s32.totalorder %s231, %s232
      %p244 = scmp.eq.s32.totalorder %s37, 1
      %p245 = por %p243, %p244
      %p247 = scmp.ne.s32.totalorder %s232, %s246
      %p248 = scmp.eq.s32.totalorder %s37, 0
      %p249 = por %p247, %p248
      %s251 = sadd.s32 %s250, 1
      %p254 = scmp.eq.s32.totalorder %s31, 1
      %p255 = scmp.ne.s32.totalorder %s250, %s252
      %p256 = scmp.eq.s32.totalorder %s31, 0
      %p257 = por %p255, %p256
      %p258 = scmp.ne.s32.totalorder %s250, %s252
      %p259 = scmp.eq.s32.totalorder %s36, 1
      %p260 = por %p258, %p259
      %p261 = scmp.ne.s32.totalorder %s252, %s253
      %p262 = scmp.eq.s32.totalorder %s36, 0
      %p263 = por %p261, %p262
      %p264 = scmp.ne.s32.totalorder %s252, %s253
      %p265 = scmp.eq.s32.totalorder %s37, 1
      %p266 = por %p264, %p265
      %p268 = scmp.ne.s32.totalorder %s253, %s267
      %p269 = scmp.eq.s32.totalorder %s37, 0
      %p270 = por %p268, %p269
      %s272 = sadd.s32 %s271, 1
      %p275 = scmp.eq.s32.totalorder %s31, 1
      %p276 = scmp.ne.s32.totalorder %s271, %s273
      %p277 = scmp.eq.s32.totalorder %s31, 0
      %p278 = por %p276, %p277
      %p279 = scmp.ne.s32.totalorder %s271, %s273
      %p280 = scmp.eq.s32.totalorder %s36, 1
      %p281 = por %p279, %p280
      %p282 = scmp.ne.s32.totalorder %s273, %s274
      %p283 = scmp.eq.s32.totalorder %s36, 0
      %p284 = por %p282, %p283
      %p285 = scmp.ne.s32.totalorder %s273, %s274
      %p286 = scmp.eq.s32.totalorder %s37, 1
      %p287 = por %p285, %p286
      %p289 = scmp.ne.s32.totalorder %s274, %s288
      %p290 = scmp.eq.s32.totalorder %s37, 0
      %p291 = por %p289, %p290
      %s293 = sadd.s32 %s292, 1
      %p296 = scmp.eq.s32.totalorder %s31, 1
      %p297 = scmp.ne.s32.totalorder %s292, %s294
      %p298 = scmp.eq.s32.totalorder %s31, 0
      %p299 = por %p297, %p298
      %p300 = scmp.ne.s32.totalorder %s292, %s294
      %p301 = scmp.eq.s32.totalorder %s36, 1
      %p302 = por %p300, %p301
      %p303 = scmp.ne.s32.totalorder %s294, %s295
      %p304 = scmp.eq.s32.totalorder %s36, 0
      %p305 = por %p303, %p304
      %p306 = scmp.ne.s32.totalorder %s294, %s295
      %p307 = scmp.eq.s32.totalorder %s37, 1
      %p308 = por %p306, %p307
      %p310 = scmp.ne.s32.totalorder %s295, %s309
      %p311 = scmp.eq.s32.totalorder %s37, 0
      %p312 = por %p310, %p311
      %s314 = sadd.s32 %s313, 1
      %p317 = scmp.eq.s32.totalorder %s31, 1
      %p318 = scmp.ne.s32.totalorder %s313, %s315
      %p319 = scmp.eq.s32.totalorder %s31, 0
      %p320 = por %p318, %p319
      %p321 = scmp.ne.s32.totalorder %s313, %s315
      %p322 = scmp.eq.s32.totalorder %s36, 1
      %p323 = por %p321, %p322
      %p324 = scmp.ne.s32.totalorder %s315, %s316
      %p325 = scmp.eq.s32.totalorder %s36, 0
      %p326 = por %p324, %p325
      %p327 = scmp.ne.s32.totalorder %s315, %s316
      %p328 = scmp.eq.s32.totalorder %s37, 1
      %p329 = por %p327, %p328
      %p331 = scmp.ne.s32.totalorder %s316, %s330
      %p332 = scmp.eq.s32.totalorder %s37, 0
      %p333 = por %p331, %p332
      %s335 = sadd.s32 %s334, 1
      %p338 = scmp.eq.s32.totalorder %s31, 1
      %p339 = scmp.ne.s32.totalorder %s334, %s336
      %p340 = scmp.eq.s32.totalorder %s31, 0
      %p341 = por %p339, %p340
      %p342 = scmp.ne.s32.totalorder %s334, %s336
      %p343 = scmp.eq.s32.totalorder %s36, 1
      %p344 = por %p342, %p343
      %p345 = scmp.ne.s32.totalorder %s336, %s337
      %p346 = scmp.eq.s32.totalorder %s36, 0
      %p347 = por %p345, %p346
      %p348 = scmp.ne.s32.totalorder %s336, %s337
      %p349 = scmp.eq.s32.totalorder %s37, 1
      %p350 = por %p348, %p349
      %p352 = scmp.ne.s32.totalorder %s337, %s351
      %p353 = scmp.eq.s32.totalorder %s37, 0
      %p354 = por %p352, %p353
      %s356 = sadd.s32 %s355, 1
      %p359 = scmp.eq.s32.totalorder %s31, 1
      %p360 = scmp.ne.s32.totalorder %s355, %s357
      %p361 = scmp.eq.s32.totalorder %s31, 0
      %p362 = por %p360, %p361
      %p363 = scmp.ne.s32.totalorder %s355, %s357
      %p364 = scmp.eq.s32.totalorder %s36, 1
      %p365 = por %p363, %p364
      %p366 = scmp.ne.s32.totalorder %s357, %s358
      %p367 = scmp.eq.s32.totalorder %s36, 0
      %p368 = por %p366, %p367
      %p369 = scmp.ne.s32.totalorder %s357, %s358
      %p370 = scmp.eq.s32.totalorder %s37, 1
      %p371 = por %p369, %p370
      %p373 = scmp.ne.s32.totalorder %s358, %s372
      %p374 = scmp.eq.s32.totalorder %s37, 0
      %p375 = por %p373, %p374
      %s377 = sadd.s32 %s376, 1
      %p380 = scmp.eq.s32.totalorder %s31, 1
      %p381 = scmp.ne.s32.totalorder %s376, %s378
      %p382 = scmp.eq.s32.totalorder %s31, 0
      %p383 = por %p381, %p382
      %p384 = scmp.ne.s32.totalorder %s376, %s378
      %p385 = scmp.eq.s32.totalorder %s36, 1
      %p386 = por %p384, %p385
      %p387 = scmp.ne.s32.totalorder %s378, %s379
      %p388 = scmp.eq.s32.totalorder %s36, 0
      %p389 = por %p387, %p388
      %p390 = scmp.ne.s32.totalorder %s378, %s379
      %p391 = scmp.eq.s32.totalorder %s37, 1
      %p392 = por %p390, %p391
      %p394 = scmp.ne.s32.totalorder %s379, %s393
      %p395 = scmp.eq.s32.totalorder %s37, 0
      %p396 = por %p394, %p395
      %s397 = ssub.s32 %s38, %s50
      %s398 = ssub.s32 %s39, %s46
      %s399 = sor.u32 %s397, %s398
      %p400 = scmp.eq.s32.totalorder %s399, 0
      %s402 = sadd.s32 %s401, 1
      %s403 = scalar_select %p400, %s401, %s402
      %p406 = pneg %p400
      %p407 = scmp.eq.s32.totalorder %s31, 1
      %p408 = por %p406, %p407
      %p409 = scmp.ne.s32.totalorder %s401, %s404
      %p410 = scmp.eq.s32.totalorder %s31, 0
      %p411 = por %p409, %p410
      %p412 = scmp.ne.s32.totalorder %s401, %s404
      %p413 = scmp.eq.s32.totalorder %s36, 1
      %p414 = por %p412, %p413
      %p415 = scmp.ne.s32.totalorder %s404, %s405
      %p416 = scmp.eq.s32.totalorder %s36, 0
      %p417 = por %p415, %p416
      %p418 = scmp.ne.s32.totalorder %s404, %s405
      %p419 = scmp.eq.s32.totalorder %s37, 1
      %p420 = por %p418, %p419
      %p422 = scmp.ne.s32.totalorder %s405, %s421
      %p423 = scmp.eq.s32.totalorder %s37, 0
      %p424 = por %p422, %p423
      %p425 = scmp.le.s32.totalorder 1, %s31
      %p426 = scmp.lt.s32.totalorder %s31, 3
      %p427 = pnand %p425, %p426
      %p428 = pneg %p427
      // Predicated region
      $region9: #{tpu_custom_call.1} parent=5 // pred_check
        _
      $region10: #{tpu_custom_call.1} parent=5 // pred_check_branch
        %430 = sbr.rel (%p427) target = $region12
      $region11: #{tpu_custom_call.1} parent=5 // pred_region
        %s431 = ssub.s32 %s31, 1
        // Predicated region
        $region13: #{tpu_custom_call.1} parent=11 // pred_check
          %p432 = pneg %p200
        $region14: #{tpu_custom_call.1} parent=11 // pred_check_branch
          %434 = sbr.rel (%p432) target = $region16
        $region15: #{tpu_custom_call.1} parent=11 // pred_region
          %436 = vsyncadd [#allocation9], 0
          %s437 = sshll.u32 %s5, 4
          %s438 = int_to_ptr.hbm [resolvable:$true] %s437
          %s439 = sshll.u32 [#allocation8], 4
          %s440 = int_to_ptr.vmem [resolvable:$true] %s439
          %445 = dma.hbm_to_vmem [thread:$0]  %s438, 256, %s440, [#allocation9], 64, 64, 4
        $region16: #{tpu_custom_call.1} parent=11 // pred_fallthru
          _
        // Predicated region
        $region17: #{tpu_custom_call.1} parent=11 // pred_check
          %p446 = pneg %p221
        $region18: #{tpu_custom_call.1} parent=11 // pred_check_branch
          %448 = sbr.rel (%p446) target = $region20
        $region19: #{tpu_custom_call.1} parent=11 // pred_region
          _
        $region20: #{tpu_custom_call.1} parent=11 // pred_fallthru
          _
        // Predicated region
        $region21: #{tpu_custom_call.1} parent=11 // pred_check
          %p449 = pneg %p242
        $region22: #{tpu_custom_call.1} parent=11 // pred_check_branch
          %451 = sbr.rel (%p449) target = $region24
        $region23: #{tpu_custom_call.1} parent=11 // pred_region
          _
        $region24: #{tpu_custom_call.1} parent=11 // pred_fallthru
          _
        // Predicated region
        $region25: #{tpu_custom_call.1} parent=11 // pred_check
          %p452 = pneg %p263
        $region26: #{tpu_custom_call.1} parent=11 // pred_check_branch
          %454 = sbr.rel (%p452) target = $region28
        $region27: #{tpu_custom_call.1} parent=11 // pred_region
          _
        $region28: #{tpu_custom_call.1} parent=11 // pred_fallthru
          _
        // Predicated region
        $region29: #{tpu_custom_call.1} parent=11 // pred_check
          %p455 = pneg %p284
        $region30: #{tpu_custom_call.1} parent=11 // pred_check_branch
          %457 = sbr.rel (%p455) target = $region32
        $region31: #{tpu_custom_call.1} parent=11 // pred_region
          %459 = vsyncadd [#allocation9], 0
          %s460 = sshll.u32 %s9, 4
          %s461 = int_to_ptr.hbm [resolvable:$true] %s460
          %s462 = sshll.u32 [#allocation10], 4
          %s463 = int_to_ptr.vmem [resolvable:$true] %s462
          %468 = dma.hbm_to_vmem [thread:$0]  %s461, 256, %s463, [#allocation9], 64, 64, 4
        $region32: #{tpu_custom_call.1} parent=11 // pred_fallthru
          _
        // Predicated region
        $region33: #{tpu_custom_call.1} parent=11 // pred_check
          %p469 = pneg %p305
        $region34: #{tpu_custom_call.1} parent=11 // pred_check_branch
          %471 = sbr.rel (%p469) target = $region36
        $region35: #{tpu_custom_call.1} parent=11 // pred_region
          _
        $region36: #{tpu_custom_call.1} parent=11 // pred_fallthru
          _
        // Predicated region
        $region37: #{tpu_custom_call.1} parent=11 // pred_check
          %p472 = pneg %p326
        $region38: #{tpu_custom_call.1} parent=11 // pred_check_branch
          %474 = sbr.rel (%p472) target = $region40
        $region39: #{tpu_custom_call.1} parent=11 // pred_region
          _
        $region40: #{tpu_custom_call.1} parent=11 // pred_fallthru
          _
        // Predicated region
        $region41: #{tpu_custom_call.1} parent=11 // pred_check
          %p475 = pneg %p347
        $region42: #{tpu_custom_call.1} parent=11 // pred_check_branch
          %477 = sbr.rel (%p475) target = $region44
        $region43: #{tpu_custom_call.1} parent=11 // pred_region
          _
        $region44: #{tpu_custom_call.1} parent=11 // pred_fallthru
          _
        // Predicated region
        $region45: #{tpu_custom_call.1} parent=11 // pred_check
          %p478 = pneg %p368
        $region46: #{tpu_custom_call.1} parent=11 // pred_check_branch
          %480 = sbr.rel (%p478) target = $region48
        $region47: #{tpu_custom_call.1} parent=11 // pred_region
          _
        $region48: #{tpu_custom_call.1} parent=11 // pred_fallthru
          _
        // Predicated region
        $region49: #{tpu_custom_call.1} parent=11 // pred_check
          %p481 = pneg %p389
        $region50: #{tpu_custom_call.1} parent=11 // pred_check_branch
          %483 = sbr.rel (%p481) target = $region52
        $region51: #{tpu_custom_call.1} parent=11 // pred_region
          _
        $region52: #{tpu_custom_call.1} parent=11 // pred_fallthru
          _
      $region12: #{tpu_custom_call.1} parent=5 // pred_fallthru
        _
      %p484 = scmp.lt.s32.totalorder %s31, 2
      // Predicated region
      $region53: #{tpu_custom_call.1} parent=5 // pred_check
        %p485 = pneg %p484
      $region54: #{tpu_custom_call.1} parent=5 // pred_check_branch
        %487 = sbr.rel (%p485) target = $region56
      $region55: #{tpu_custom_call.1} parent=5 // pred_region
        // Predicated region
        $region57: #{tpu_custom_call.1} parent=55 // pred_check
          %p488 = pneg %p65
        $region58: #{tpu_custom_call.1} parent=55 // pred_check_branch
          %490 = sbr.rel (%p488) target = $region60
        $region59: #{tpu_custom_call.1} parent=55 // pred_region
          %p491 = scmp.lt.s32.totalorder %s38, 1
          %s492 = scalar_select %p491, %s38, 1
          %p493 = scmp.lt.s32.totalorder %s39, 0
          %s494 = scalar_select %p493, %s39, 0
          %s495 = sadd.s32 %s494, %s492
          %s496 = smul.addr %s495, 8
          %s497 = scalar_lea.vmem %s0, %s496
        $region60: #{tpu_custom_call.1} parent=55 // pred_fallthru
          _
        // Predicated region
        $region61: #{tpu_custom_call.1} parent=55 // pred_check
          %p498 = pneg %p93
        $region62: #{tpu_custom_call.1} parent=55 // pred_check_branch
          %500 = sbr.rel (%p498) target = $region64
        $region63: #{tpu_custom_call.1} parent=55 // pred_region
          %p501 = scmp.lt.s32.totalorder %s38, 1
          %s502 = scalar_select %p501, %s38, 1
          %p503 = scmp.lt.s32.totalorder %s39, 0
          %s504 = scalar_select %p503, %s39, 0
          %s505 = smul.addr %s502, 4
          %s506 = sadd.s32 %s504, %s505
          %s507 = smul.addr %s506, 4
          %s508 = scalar_lea.vmem %s1, %s507
        $region64: #{tpu_custom_call.1} parent=55 // pred_fallthru
          _
        // Predicated region
        $region65: #{tpu_custom_call.1} parent=55 // pred_check
          %p509 = pneg %p119
        $region66: #{tpu_custom_call.1} parent=55 // pred_check_branch
          %511 = sbr.rel (%p509) target = $region68
        $region67: #{tpu_custom_call.1} parent=55 // pred_region
          %s512 = sand.u32 %s109, 1
          %s513 = scalar_lea.sflag [#allocation3], %s512
          %s514 = sand.u32 %s109, 1
          %s515 = smul.addr %s514, 16
          %s516 = scalar_lea.vmem [#allocation2], %s515
          %518 = vsyncadd %s513, 0
          %s519 = smul.addr %s38, 4
          %s520 = smul.addr %s519, 4
          %s521 = scalar_lea.hbm %s2, %s520
          %s522 = sshll.u32 %s521, 4
          %s523 = int_to_ptr.hbm [resolvable:$true] %s522
          %s524 = sshll.u32 %s516, 4
          %s525 = int_to_ptr.vmem [resolvable:$true] %s524
          %530 = dma.hbm_to_vmem [thread:$0]  %s523, 256, %s525, %s513, 64, 64, 4
        $region68: #{tpu_custom_call.1} parent=55 // pred_fallthru
          _
        // Predicated region
        $region69: #{tpu_custom_call.1} parent=55 // pred_check
          %p531 = pneg %p145
        $region70: #{tpu_custom_call.1} parent=55 // pred_check_branch
          %533 = sbr.rel (%p531) target = $region72
        $region71: #{tpu_custom_call.1} parent=55 // pred_region
          %s534 = sand.u32 %s31, 1
          %s535 = scalar_lea.sflag [#allocation6], %s534
          %s536 = sand.u32 %s135, 1
          %s537 = smul.addr %s536, 16
          %s538 = scalar_lea.vmem [#allocation5], %s537
          %540 = vsyncadd %s535, 0
          %s541 = smul.addr %s38, 4
          %s542 = smul.addr %s541, 4
          %s543 = scalar_lea.hbm %s3, %s542
          %s544 = sshll.u32 %s543, 4
          %s545 = int_to_ptr.hbm [resolvable:$true] %s544
          %s546 = sshll.u32 %s538, 4
          %s547 = int_to_ptr.vmem [resolvable:$true] %s546
          %552 = dma.hbm_to_vmem [thread:$0]  %s545, 256, %s547, %s535, 64, 64, 4
        $region72: #{tpu_custom_call.1} parent=55 // pred_fallthru
          _
        // Predicated region
        $region73: #{tpu_custom_call.1} parent=55 // pred_check
          %p553 = pneg %p173
        $region74: #{tpu_custom_call.1} parent=55 // pred_check_branch
          %555 = sbr.rel (%p553) target = $region76
        $region75: #{tpu_custom_call.1} parent=55 // pred_region
          %s556 = sand.u32 %s31, 1
          %s557 = scalar_lea.sflag [#allocation6], %s556
          %s558 = sand.u32 %s163, 1
          %s559 = smul.addr %s558, 8
          %s560 = scalar_lea.vmem [#allocation7], %s559
          %562 = vsyncadd %s557, 0
          %s563 = sadd.s32 %s39, %s38
          %s564 = smul.addr %s563, 8
          %s565 = scalar_lea.hbm %s4, %s564
          %s567 = sshll.u32 %s565, 4
          %s568 = int_to_ptr.hbm [resolvable:$true] %s567
          %s569 = sshll.u32 %s560, 4
          %s570 = int_to_ptr.vmem [resolvable:$true] %s569
          %572 = dma.hbm_to_vmem [thread:$0]  %s568, 128, %s570, %s557
        $region76: #{tpu_custom_call.1} parent=55 // pred_fallthru
          _
      $region56: #{tpu_custom_call.1} parent=5 // pred_fallthru
        _
      %p573 = scmp.le.s32.totalorder 1, %s31
      %p574 = scmp.lt.s32.totalorder %s31, 3
      %p575 = pnand %p573, %p574
      %p576 = pneg %p575
      // Predicated region
      $region77: #{tpu_custom_call.1} parent=5 // pred_check
        _
      $region78: #{tpu_custom_call.1} parent=5 // pred_check_branch
        %578 = sbr.rel (%p575) target = $region80
      $region79: #{tpu_custom_call.1} parent=5 // pred_region
        %s579 = ssub.s32 %s31, 1
        %s580 = sand.u32 %s112, 1
        %s581 = scalar_lea.sflag [#allocation3], %s580
        %s582 = sand.u32 %s112, 1
        %s583 = smul.addr %s582, 16
        %s584 = scalar_lea.vmem [#allocation2], %s583
        // Predicated region
        $region81: #{tpu_custom_call.1} parent=79 // pred_check
          %p585 = pneg %p125
        $region82: #{tpu_custom_call.1} parent=79 // pred_check_branch
          %587 = sbr.rel (%p585) target = $region84
        $region83: #{tpu_custom_call.1} parent=79 // pred_region
          %589 = dma.done %s581, 256
        $region84: #{tpu_custom_call.1} parent=79 // pred_fallthru
          _
        %s590 = sand.u32 %s36, 1
        %s591 = scalar_lea.sflag [#allocation6], %s590
        %s592 = sand.u32 %s138, 1
        %s593 = smul.addr %s592, 16
        %s594 = scalar_lea.vmem [#allocation5], %s593
        // Predicated region
        $region85: #{tpu_custom_call.1} parent=79 // pred_check
          %p595 = pneg %p151
        $region86: #{tpu_custom_call.1} parent=79 // pred_check_branch
          %597 = sbr.rel (%p595) target = $region88
        $region87: #{tpu_custom_call.1} parent=79 // pred_region
          %599 = dma.done %s591, 256
        $region88: #{tpu_custom_call.1} parent=79 // pred_fallthru
          _
        %s600 = sand.u32 %s36, 1
        %s601 = scalar_lea.sflag [#allocation6], %s600
        %s602 = sand.u32 %s166, 1
        %s603 = smul.addr %s602, 8
        %s604 = scalar_lea.vmem [#allocation7], %s603
        // Predicated region
        $region89: #{tpu_custom_call.1} parent=79 // pred_check
          %p605 = pneg %p179
        $region90: #{tpu_custom_call.1} parent=79 // pred_check_branch
          %607 = sbr.rel (%p605) target = $region92
        $region91: #{tpu_custom_call.1} parent=79 // pred_region
          %609 = dma.done %s601, 128
        $region92: #{tpu_custom_call.1} parent=79 // pred_fallthru
          _
        // Predicated region
        $region93: #{tpu_custom_call.1} parent=79 // pred_check
          %p610 = pneg %p200
        $region94: #{tpu_custom_call.1} parent=79 // pred_check_branch
          %612 = sbr.rel (%p610) target = $region96
        $region95: #{tpu_custom_call.1} parent=79 // pred_region
          %614 = dma.done [#allocation9], 256
        $region96: #{tpu_custom_call.1} parent=79 // pred_fallthru
          _
        // Predicated region
        $region97: #{tpu_custom_call.1} parent=79 // pred_check
          %p615 = pneg %p284
        $region98: #{tpu_custom_call.1} parent=79 // pred_check_branch
          %617 = sbr.rel (%p615) target = $region100
        $region99: #{tpu_custom_call.1} parent=79 // pred_region
          %619 = dma.done [#allocation9], 256
        $region100: #{tpu_custom_call.1} parent=79 // pred_fallthru
          _
        %p620 = scmp.lt.s32.totalorder %s40, 1
        %s621 = scalar_select %p620, %s40, 1
        %p622 = scmp.lt.s32.totalorder %s41, 0
        %s623 = scalar_select %p622, %s41, 0
        %s624 = sadd.s32 %s623, %s621
        %s625 = smul.addr %s624, 8
        %s626 = scalar_lea.vmem %s0, %s625
        %p627 = pneg %p71
        %p628 = pneg %p68
        %p629 = scmp.lt.s32.totalorder %s40, 1
        %s630 = scalar_select %p629, %s40, 1
        %p631 = scmp.lt.s32.totalorder %s41, 0
        %s632 = scalar_select %p631, %s41, 0
        %s633 = smul.addr %s630, 4
        %s634 = sadd.s32 %s632, %s633
        %s635 = smul.addr %s634, 4
        %s636 = scalar_lea.vmem %s1, %s635
        %p637 = pneg %p99
        %p638 = pneg %p96
        %s639 = sand.u32 %s112, 1
        %s640 = scalar_lea.sflag [#allocation3], %s639
        %s641 = sand.u32 %s112, 1
        %s642 = smul.addr %s641, 16
        %s643 = scalar_lea.vmem [#allocation2], %s642
        %p644 = pneg %p125
        %p645 = pneg %p122
        %s646 = sand.u32 %s36, 1
        %s647 = scalar_lea.sflag [#allocation6], %s646
        %s648 = sand.u32 %s138, 1
        %s649 = smul.addr %s648, 16
        %s650 = scalar_lea.vmem [#allocation5], %s649
        %p651 = pneg %p151
        %p652 = pneg %p148
        %s653 = sand.u32 %s36, 1
        %s654 = scalar_lea.sflag [#allocation6], %s653
        %s655 = sand.u32 %s166, 1
        %s656 = smul.addr %s655, 8
        %s657 = scalar_lea.vmem [#allocation7], %s656
        %p658 = pneg %p179
        %p659 = pneg %p176
        %p660 = pneg %p200
        %p661 = pneg %p197
        %p662 = pneg %p221
        %p663 = pneg %p218
        %p664 = pneg %p242
        %p665 = pneg %p239
        %p666 = pneg %p263
        %p667 = pneg %p260
        %p668 = pneg %p284
        %p669 = pneg %p281
        %p670 = pneg %p305
        %p671 = pneg %p302
        %p672 = pneg %p326
        %p673 = pneg %p323
        %p674 = pneg %p347
        %p675 = pneg %p344
        %p676 = pneg %p368
        %p677 = pneg %p365
        %p678 = pneg %p389
        %p679 = pneg %p386
        %p680 = pneg %p417
        %p681 = pneg %p414
        %s682 = sand.u32 %s404, 1
        %s683 = scalar_lea.sflag [#allocation4], %s682
        %s684 = sand.u32 %s404, 1
        %s685 = smul.addr %s684, 8
        %s686 = scalar_lea.vmem [#allocation11], %s685
        %p687 = scmp.lt.s32.totalorder %s40, 1
        %s688 = scalar_select %p687, %s40, 1
        %p689 = scmp.lt.s32.totalorder %s41, 0
        %s690 = scalar_select %p689, %s41, 0
        %s691 = sadd.s32 %s690, %s688
        %s692 = smul.addr %s691, 8
        %s693 = scalar_lea.vmem %s0, %s692
        %p694 = scmp.lt.s32.totalorder %s40, 1
        %s695 = scalar_select %p694, %s40, 1
        %p696 = scmp.lt.s32.totalorder %s41, 0
        %s697 = scalar_select %p696, %s41, 0
        %s698 = smul.addr %s695, 4
        %s699 = sadd.s32 %s697, %s698
        %s700 = smul.addr %s699, 4
        %s701 = scalar_lea.vmem %s1, %s700
        %v703 = vld [vmem:[%s693] sm:$0xff]
        %v704 = vld [vmem:[%s701] sm:$0xf]
        %v705 = vld [vmem:[%s701 + $0x4] sm:$0xf]
        %v706 = vld [vmem:[%s701 + $0x8] sm:$0xf]
        %v707 = vld [vmem:[%s701 + $0xc] sm:$0xf]
        %v708 = vld [vmem:[%s584] sm:$0xf]
        %v709 = vld [vmem:[%s584 + $0x4] sm:$0xf]
        %v710 = vld [vmem:[%s584 + $0x8] sm:$0xf]
        %v711 = vld [vmem:[%s584 + $0xc] sm:$0xf]
        %v712 = vld [vmem:[%s594] sm:$0xf]
        %v713 = vld [vmem:[%s594 + $0x4] sm:$0xf]
        %v714 = vld [vmem:[%s594 + $0x8] sm:$0xf]
        %v715 = vld [vmem:[%s594 + $0xc] sm:$0xf]
        %v716 = vld [vmem:[%s604] sm:$0xff]
        %vm717 = vcmask 64512
        %v719 = vsel %vm717, %v704, 0
        %v722 = vsel %vm717, %v708, 0
        %724 = vmatpush.bf16.xpose.msra.mxu0 0
        %725 = vmatpush.bf16.xpose.msra.mxu0 0
        %726 = vmatpush.bf16.xpose.msra.mxu0 0
        %727 = vmatpush.bf16.xpose.msra.mxu0 0
        %728 = vmatpush.bf16.xpose.msra.mxu0 0
        %729 = vmatpush.bf16.xpose.msra.mxu0 0
        %730 = vmatpush.bf16.xpose.msra.mxu0 0
        %731 = vmatpush.bf16.xpose.msra.mxu0 %v722
        %732 = vmatmul.bf16.gmra.mxu0 %v719
        %v733 = vpop.f32.mrf.mxu0
        %v734 = vadd.f32 %v716, %v733
        %v735 = vpop.f32.mrf.mxu0
        %736 = vdwg.mxu0
        %v738 = vsel %vm717, %v705, 0
        %v741 = vsel %vm717, %v709, 0
        %743 = vmatpush.bf16.xpose.msra.mxu0 0
        %744 = vmatpush.bf16.xpose.msra.mxu0 0
        %745 = vmatpush.bf16.xpose.msra.mxu0 0
        %746 = vmatpush.bf16.xpose.msra.mxu0 0
        %747 = vmatpush.bf16.xpose.msra.mxu0 0
        %748 = vmatpush.bf16.xpose.msra.mxu0 0
        %749 = vmatpush.bf16.xpose.msra.mxu0 0
        %750 = vmatpush.bf16.xpose.msra.mxu0 %v741
        %751 = vmatmul.bf16.gmra.mxu0 %v738
        %v752 = vpop.f32.mrf.mxu0
        %v753 = vadd.f32 %v716, %v752
        %v754 = vpop.f32.mrf.mxu0
        %755 = vdwg.mxu0
        %v757 = vsel %vm717, %v706, 0
        %v760 = vsel %vm717, %v710, 0
        %762 = vmatpush.bf16.xpose.msra.mxu0 0
        %763 = vmatpush.bf16.xpose.msra.mxu0 0
        %764 = vmatpush.bf16.xpose.msra.mxu0 0
        %765 = vmatpush.bf16.xpose.msra.mxu0 0
        %766 = vmatpush.bf16.xpose.msra.mxu0 0
        %767 = vmatpush.bf16.xpose.msra.mxu0 0
        %768 = vmatpush.bf16.xpose.msra.mxu0 0
        %769 = vmatpush.bf16.xpose.msra.mxu0 %v760
        %770 = vmatmul.bf16.gmra.mxu0 %v757
        %v771 = vpop.f32.mrf.mxu0
        %v772 = vadd.f32 %v716, %v771
        %v773 = vpop.f32.mrf.mxu0
        %774 = vdwg.mxu0
        %v776 = vsel %vm717, %v707, 0
        %v779 = vsel %vm717, %v711, 0
        %781 = vmatpush.bf16.xpose.msra.mxu0 0
        %782 = vmatpush.bf16.xpose.msra.mxu0 0
        %783 = vmatpush.bf16.xpose.msra.mxu0 0
        %784 = vmatpush.bf16.xpose.msra.mxu0 0
        %785 = vmatpush.bf16.xpose.msra.mxu0 0
        %786 = vmatpush.bf16.xpose.msra.mxu0 0
        %787 = vmatpush.bf16.xpose.msra.mxu0 0
        %788 = vmatpush.bf16.xpose.msra.mxu0 %v779
        %789 = vmatmul.bf16.gmra.mxu0 %v776
        %v790 = vpop.f32.mrf.mxu0
        %v791 = vadd.f32 %v716, %v790
        %v792 = vpop.f32.mrf.mxu0
        %793 = vdwg.mxu0
        %v794 = vsel %vm717, %v734, -inf
        %795 = vmax.xlane.f32.xlu0 %v794
        %v796 = vpop.xlane.xlu0 %795
        %v797 = vsel %vm717, %v753, -inf
        %798 = vmax.xlane.f32.xlu0 %v797
        %v799 = vpop.xlane.xlu0 %798
        %v800 = vsel %vm717, %v772, -inf
        %801 = vmax.xlane.f32.xlu0 %v800
        %v802 = vpop.xlane.xlu0 %801
        %v803 = vsel %vm717, %v791, -inf
        %804 = vmax.xlane.f32.xlu0 %v803
        %v805 = vpop.xlane.xlu0 %804
        %v806 = vsub.f32 %v734, %v796
        %v807 = vsub.f32 %v753, %v799
        %v808 = vsub.f32 %v772, %v802
        %v809 = vsub.f32 %v791, %v805
        %v810 = vmul.f32 %v806, 1.442695
        %v811 = vpow.pop %v810
        %v812 = vmul.f32 %v807, 1.442695
        %v813 = vpow.pop %v812
        %v814 = vmul.f32 %v808, 1.442695
        %v815 = vpow.pop %v814
        %v816 = vmul.f32 %v809, 1.442695
        %v817 = vpow.pop %v816
        %v818 = vsel %vm717, %v811, 0.0
        %819 = vadd.xlane.f32.xlu0 %v818
        %v820 = vpop.xlane.xlu0 %819
        %v821 = vsel %vm717, %v813, 0.0
        %822 = vadd.xlane.f32.xlu0 %v821
        %v823 = vpop.xlane.xlu0 %822
        %v824 = vsel %vm717, %v815, 0.0
        %825 = vadd.xlane.f32.xlu0 %v824
        %v826 = vpop.xlane.xlu0 %825
        %v827 = vsel %vm717, %v817, 0.0
        %828 = vadd.xlane.f32.xlu0 %v827
        %v829 = vpop.xlane.xlu0 %828
        %v830 = vpack.c.bf16 %v811, %v811
        %v831 = vpack.c.bf16 %v813, %v813
        %v832 = vpack.c.bf16 %v815, %v815
        %v833 = vpack.c.bf16 %v817, %v817
        %v835 = vsel %vm717, %v830, 0
        %vm837 = vcmask 1043456
        %v839 = vsel %vm837, %v712, 0
        %841 = vmatpush.bf16.msra.mxu0 0
        %842 = vmatpush.bf16.msra.mxu0 0
        %843 = vmatpush.bf16.msra.mxu0 0
        %844 = vmatpush.bf16.msra.mxu0 0
        %845 = vmatpush.bf16.msra.mxu0 0
        %846 = vmatpush.bf16.msra.mxu0 0
        %847 = vmatpush.bf16.msra.mxu0 0
        %848 = vmatpush.bf16.msra.mxu0 %v839
        %849 = vmatmul.bf16.gmra.mxu0 %v835
        %v850 = vpop.f32.mrf.mxu0
        %v851 = vadd.f32 0.0, %v850
        %v852 = vpop.f32.mrf.mxu0
        %853 = vdwg.mxu0
        %v855 = vsel %vm717, %v831, 0
        %v858 = vsel %vm837, %v713, 0
        %860 = vmatpush.bf16.msra.mxu0 0
        %861 = vmatpush.bf16.msra.mxu0 0
        %862 = vmatpush.bf16.msra.mxu0 0
        %863 = vmatpush.bf16.msra.mxu0 0
        %864 = vmatpush.bf16.msra.mxu0 0
        %865 = vmatpush.bf16.msra.mxu0 0
        %866 = vmatpush.bf16.msra.mxu0 0
        %867 = vmatpush.bf16.msra.mxu0 %v858
        %868 = vmatmul.bf16.gmra.mxu0 %v855
        %v869 = vpop.f32.mrf.mxu0
        %v870 = vadd.f32 0.0, %v869
        %v871 = vpop.f32.mrf.mxu0
        %872 = vdwg.mxu0
        %v874 = vsel %vm717, %v832, 0
        %v877 = vsel %vm837, %v714, 0
        %879 = vmatpush.bf16.msra.mxu0 0
        %880 = vmatpush.bf16.msra.mxu0 0
        %881 = vmatpush.bf16.msra.mxu0 0
        %882 = vmatpush.bf16.msra.mxu0 0
        %883 = vmatpush.bf16.msra.mxu0 0
        %884 = vmatpush.bf16.msra.mxu0 0
        %885 = vmatpush.bf16.msra.mxu0 0
        %886 = vmatpush.bf16.msra.mxu0 %v877
        %887 = vmatmul.bf16.gmra.mxu0 %v874
        %v888 = vpop.f32.mrf.mxu0
        %v889 = vadd.f32 0.0, %v888
        %v890 = vpop.f32.mrf.mxu0
        %891 = vdwg.mxu0
        %v893 = vsel %vm717, %v833, 0
        %v896 = vsel %vm837, %v715, 0
        %898 = vmatpush.bf16.msra.mxu0 0
        %899 = vmatpush.bf16.msra.mxu0 0
        %900 = vmatpush.bf16.msra.mxu0 0
        %901 = vmatpush.bf16.msra.mxu0 0
        %902 = vmatpush.bf16.msra.mxu0 0
        %903 = vmatpush.bf16.msra.mxu0 0
        %904 = vmatpush.bf16.msra.mxu0 0
        %905 = vmatpush.bf16.msra.mxu0 %v896
        %906 = vmatmul.bf16.gmra.mxu0 %v893
        %v907 = vpop.f32.mrf.mxu0
        %v908 = vadd.f32 0.0, %v907
        %v909 = vpop.f32.mrf.mxu0
        %910 = vdwg.mxu0
        %v911 = vrcp.pop %v820
        %v912 = vrcp.pop %v823
        %v913 = vrcp.pop %v826
        %v914 = vrcp.pop %v829
        %v915 = vmul.f32 %v851, %v911
        %v916 = vmul.f32 %v870, %v912
        %v917 = vmul.f32 %v889, %v913
        %v918 = vmul.f32 %v908, %v914
        %v919 = vpack.c.bf16 %v915, %v915
        %v920 = vpack.c.bf16 %v916, %v916
        %v921 = vpack.c.bf16 %v917, %v917
        %v922 = vpack.c.bf16 %v918, %v918
        %v923 = vld [vmem:[#allocation8] sm:$0xf]
        %s924 = scalar_lea.vmem [#allocation8], 4
        %v925 = vld [vmem:[%s924] sm:$0xf]
        %v927 = vsel %vm717, %v920, 0
        %v930 = vsel %vm837, %v925, 0
        %932 = vmatpush.bf16.msra.mxu0 0
        %933 = vmatpush.bf16.msra.mxu0 0
        %934 = vmatpush.bf16.msra.mxu0 0
        %935 = vmatpush.bf16.msra.mxu0 0
        %936 = vmatpush.bf16.msra.mxu0 0
        %937 = vmatpush.bf16.msra.mxu0 0
        %938 = vmatpush.bf16.msra.mxu0 0
        %939 = vmatpush.bf16.msra.mxu0 %v930
        %940 = vmatmul.bf16.gmra.mxu0 %v927
        %v941 = vpop.f32.mrf.mxu0
        %v942 = vadd.f32 0.0, %v941
        %v943 = vpop.f32.mrf.mxu0
        %944 = vdwg.mxu0
        %v946 = vsel %vm717, %v919, 0
        %v949 = vsel %vm837, %v923, 0
        %951 = vmatpush.bf16.msra.mxu0 0
        %952 = vmatpush.bf16.msra.mxu0 0
        %953 = vmatpush.bf16.msra.mxu0 0
        %954 = vmatpush.bf16.msra.mxu0 0
        %955 = vmatpush.bf16.msra.mxu0 0
        %956 = vmatpush.bf16.msra.mxu0 0
        %957 = vmatpush.bf16.msra.mxu0 0
        %958 = vmatpush.bf16.msra.mxu0 %v949
        %959 = vmatmul.bf16.gmra.mxu0 %v946
        %v960 = vpop.f32.mrf.mxu0
        %v961 = vadd.f32 %v942, %v960
        %v962 = vpop.f32.mrf.mxu0
        %963 = vdwg.mxu0
        %s964 = scalar_lea.vmem [#allocation8], 8
        %v965 = vld [vmem:[%s964] sm:$0xf]
        %v967 = vsel %vm717, %v921, 0
        %v970 = vsel %vm837, %v965, 0
        %972 = vmatpush.bf16.msra.mxu0 0
        %973 = vmatpush.bf16.msra.mxu0 0
        %974 = vmatpush.bf16.msra.mxu0 0
        %975 = vmatpush.bf16.msra.mxu0 0
        %976 = vmatpush.bf16.msra.mxu0 0
        %977 = vmatpush.bf16.msra.mxu0 0
        %978 = vmatpush.bf16.msra.mxu0 0
        %979 = vmatpush.bf16.msra.mxu0 %v970
        %980 = vmatmul.bf16.gmra.mxu0 %v967
        %v981 = vpop.f32.mrf.mxu0
        %v982 = vadd.f32 0.0, %v981
        %v983 = vpop.f32.mrf.mxu0
        %984 = vdwg.mxu0
        %v985 = vadd.f32 %v961, %v982
        %s986 = scalar_lea.vmem [#allocation8], 12
        %v987 = vld [vmem:[%s986] sm:$0xf]
        %v989 = vsel %vm717, %v922, 0
        %v992 = vsel %vm837, %v987, 0
        %994 = vmatpush.bf16.msra.mxu0 0
        %995 = vmatpush.bf16.msra.mxu0 0
        %996 = vmatpush.bf16.msra.mxu0 0
        %997 = vmatpush.bf16.msra.mxu0 0
        %998 = vmatpush.bf16.msra.mxu0 0
        %999 = vmatpush.bf16.msra.mxu0 0
        %1000 = vmatpush.bf16.msra.mxu0 0
        %1001 = vmatpush.bf16.msra.mxu0 %v992
        %1002 = vmatmul.bf16.gmra.mxu0 %v989
        %v1003 = vpop.f32.mrf.mxu0
        %v1004 = vadd.f32 0.0, %v1003
        %v1005 = vpop.f32.mrf.mxu0
        %1006 = vdwg.mxu0
        %v1007 = vadd.f32 %v985, %v1004
        %v1008 = vld [vmem:[%s6] sm:$0x1]
        %v1010 = vperm.slane %v1008, 0
        %v1012 = vadd.f32 %v1007, %v1010
        %v1013 = vadd.f32 %v1012, %v703
        %v1014 = vld [vmem:[%s7] sm:$0x1]
        %v1015 = vld [vmem:[%s8] sm:$0x1]
        %vm1016 = vcmask 261120
        %v1017 = vsel %vm1016, %v1013, 0.0
        %1018 = vadd.xlane.f32.xlu0 %v1017
        %v1019 = vpop.xlane.xlu0 %1018
        %v1020 = vrcp.pop 32.0
        %v1021 = vmul.f32 32.0, %v1020
        %v1022 = vsub.f32 1.0, %v1021
        %v1023 = vmul.f32 %v1020, %v1022
        %v1024 = vadd.f32 %v1020, %v1023
        %vm1025 = vweird.f32 %v1020
        %v1026 = vsel %vm1025, %v1020, %v1024
        %v1027 = vmul.f32 %v1019, %v1026
        %v1028 = vsub.f32 %v1013, %v1027
        %v1029 = vmul.f32 %v1028, %v1028
        %v1030 = vsel %vm1016, %v1029, 0.0
        %1031 = vadd.xlane.f32.xlu0 %v1030
        %v1032 = vpop.xlane.xlu0 %1031
        %v1033 = vmul.f32 %v1032, %v1026
        %v1034 = vadd.f32 %v1033, 1e-05
        %v1035 = vrsqrt.pop %v1034
        %v1036 = vmul.f32 %v1035, %v1034
        %v1037 = vmul.f32 %v1036, %v1035
        %v1038 = vmul.f32 0.5, %v1037
        %v1039 = vsub.f32 1.5, %v1038
        %v1040 = vmul.f32 %v1035, %v1039
        %vm1041 = vweird.f32 %v1034
        %vm1042 = vweird.f32 %v1035
        %vm1043 = vmor %vm1041, %vm1042
        %v1044 = vsel %vm1043, %v1035, %v1040
        %v1045 = vmul.f32 %v1028, %v1044
        %v1047 = vperm.slane %v1014, 0
        %v1049 = vmul.f32 %v1045, %v1047
        %v1051 = vperm.slane %v1015, 0
        %v1053 = vadd.f32 %v1049, %v1051
        %v1054 = vpack.c.bf16 %v1053, %v1053
        %v1055 = vld [vmem:[#allocation10] sm:$0xf]
        %v1056 = vld [vmem:[#allocation10 + $0x4] sm:$0xf]
        %v1057 = vld [vmem:[#allocation10 + $0x8] sm:$0xf]
        %v1058 = vld [vmem:[#allocation10 + $0xc] sm:$0xf]
        %v1059 = vld [vmem:[%s10] sm:$0x1]
        %v1061 = vperm.slane %v1059, 0
        %v1067 = vunpack.c.l.b16 %v1055
        %v1068 = vunpack.c.l.b16 %v1056
        %v1069 = vunpack.c.l.b16 %v1057
        %v1070 = vunpack.c.l.b16 %v1058
        %v1071 = vpack.c.b16 %v1068, %v1067
        %v1072 = vpack.c.b16 %v1070, %v1069
        %v1076 = vsel %vm1016, %v1054, 0
        %1078 = vmatpush.bf16.msra.mxu0 0
        %1079 = vmatpush.bf16.msra.mxu0 0
        %1080 = vmatpush.bf16.msra.mxu0 0
        %1081 = vmatpush.bf16.msra.mxu0 0
        %1082 = vmatpush.bf16.msra.mxu0 0
        %1083 = vmatpush.bf16.msra.mxu0 0
        %1084 = vmatpush.bf16.msra.mxu0 %v1072
        %1085 = vmatpush.bf16.msra.mxu0 %v1071
        %1086 = vmatmul.bf16.gmra.mxu0 %v1076
        %v1087 = vpop.f32.mrf.mxu0
        %v1088 = vadd.f32 %v1061, %v1087
        %v1089 = vpop.f32.mrf.mxu0
        %1090 = vdwg.mxu0
        %v1091 = vmul.f32 %v1088, 0.5
        %v1092 = vmul.f32 %v1088, 0.70710677
        %v1093 = vmul.f32 %v1092, %v1092
        %v1094 = vmin.f32 16.0, %v1093
        %v1095 = vmul.f32 %v1094, 2.1237322e-06
        %v1096 = vadd.f32 %v1095, 0.00028619796
        %v1097 = vmul.f32 %v1094, %v1096
        %v1098 = vadd.f32 %v1097, 0.0036580483
        %v1099 = vmul.f32 %v1094, %v1098
        %v1100 = vadd.f32 %v1099, 0.05243302
        %v1101 = vmul.f32 %v1094, %v1100
        %v1102 = vadd.f32 %v1101, 0.18741608
        %v1103 = vmul.f32 %v1094, %v1102
        %v1104 = vadd.f32 %v1103, 1.1283791
        %v1105 = vmul.f32 %v1092, %v1104
        %v1106 = vmul.f32 %v1094, 3.8918573e-05
        %v1107 = vadd.f32 %v1106, 0.001143296
        %v1108 = vmul.f32 %v1094, %v1107
        %v1109 = vadd.f32 %v1108, 0.014752088
        %v1110 = vmul.f32 %v1094, %v1109
        %v1111 = vadd.f32 %v1110, 0.112945676
        %v1112 = vmul.f32 %v1094, %v1111
        %v1113 = vadd.f32 %v1112, 0.4994258
        %v1114 = vmul.f32 %v1094, %v1113
        %v1115 = vadd.f32 %v1114, 1.0
        %v1116 = vrcp.pop %v1115
        %v1117 = vmul.f32 %v1115, %v1116
        %v1118 = vsub.f32 1.0, %v1117
        %v1119 = vmul.f32 %v1116, %v1118
        %v1120 = vadd.f32 %v1116, %v1119
        %vm1121 = vweird.f32 %v1115
        %vm1122 = vweird.f32 %v1116
        %vm1123 = vmor %vm1121, %vm1122
        %v1124 = vsel %vm1123, %v1116, %v1120
        %v1125 = vand.u32 2147483647, %v1115
        %vm1126 = vcmp.eq.f32.partialorder %v1125, 8.507059e+37
        %v1127 = vand.u32 %v1115, 2147483648
        %v1128 = vor.u32 1.1754944e-38, %v1127
        %v1129 = vsel %vm1126, %v1128, %v1124
        %v1130 = vmul.f32 %v1105, %v1129
        %v1131 = vmin.f32 %v1130, 1.0
        %v1132 = vmax.f32 %v1131, -1.0
        %v1133 = vadd.f32 %v1132, 1.0
        %v1134 = vmul.f32 %v1091, %v1133
        %v1135 = vpack.c.bf16 %v1134, %v1134
        %v1136 = vld [vmem:[%s11] sm:$0xf]
        %v1137 = vld [vmem:[%s11 + $0x4] sm:$0xf]
        %v1138 = vld [vmem:[%s11 + $0x8] sm:$0xf]
        %v1139 = vld [vmem:[%s11 + $0xc] sm:$0xf]
        %v1140 = vld [vmem:[%s11 + $0x10] sm:$0xf]
        %v1141 = vld [vmem:[%s11 + $0x14] sm:$0xf]
        %v1142 = vld [vmem:[%s11 + $0x18] sm:$0xf]
        %v1143 = vld [vmem:[%s11 + $0x1c] sm:$0xf]
        %v1144 = vld [vmem:[%s12] sm:$0x1]
        %v1146 = vperm.slane %v1144, 0
        %v1156 = vunpack.c.l.b16 %v1136
        %v1157 = vunpack.c.l.b16 %v1137
        %v1158 = vunpack.c.l.b16 %v1138
        %v1159 = vunpack.c.l.b16 %v1139
        %v1160 = vunpack.c.l.b16 %v1140
        %v1161 = vunpack.c.l.b16 %v1141
        %v1162 = vunpack.c.l.b16 %v1142
        %v1163 = vunpack.c.l.b16 %v1143
        %v1164 = vpack.c.b16 %v1157, %v1156
        %v1165 = vpack.c.b16 %v1159, %v1158
        %v1166 = vpack.c.b16 %v1161, %v1160
        %v1167 = vpack.c.b16 %v1163, %v1162
        %vm1172 = vcmask 523264
        %v1174 = vsel %vm1172, %v1135, 0
        %1176 = vmatpush.bf16.msra.mxu0 0
        %1177 = vmatpush.bf16.msra.mxu0 0
        %1178 = vmatpush.bf16.msra.mxu0 0
        %1179 = vmatpush.bf16.msra.mxu0 0
        %1180 = vmatpush.bf16.msra.mxu0 %v1167
        %1181 = vmatpush.bf16.msra.mxu0 %v1166
        %1182 = vmatpush.bf16.msra.mxu0 %v1165
        %1183 = vmatpush.bf16.msra.mxu0 %v1164
        %1184 = vmatmul.bf16.gmra.mxu0 %v1174
        %v1185 = vpop.f32.mrf.mxu0
        %v1186 = vadd.f32 %v1146, %v1185
        %v1187 = vpop.f32.mrf.mxu0
        %1188 = vdwg.mxu0
        %v1189 = vadd.f32 %v1186, %v1053
        %v1190 = vld [vmem:[%s13] sm:$0x1]
        %v1191 = vld [vmem:[%s14] sm:$0x1]
        %v1192 = vsel %vm1016, %v1189, 0.0
        %1193 = vadd.xlane.f32.xlu0 %v1192
        %v1194 = vpop.xlane.xlu0 %1193
        %v1195 = vmul.f32 %v1194, %v1026
        %v1196 = vsub.f32 %v1189, %v1195
        %v1197 = vmul.f32 %v1196, %v1196
        %v1198 = vsel %vm1016, %v1197, 0.0
        %1199 = vadd.xlane.f32.xlu0 %v1198
        %v1200 = vpop.xlane.xlu0 %1199
        %v1201 = vmul.f32 %v1200, %v1026
        %v1202 = vadd.f32 %v1201, 1e-05
        %v1203 = vrsqrt.pop %v1202
        %v1204 = vmul.f32 %v1203, %v1202
        %v1205 = vmul.f32 %v1204, %v1203
        %v1206 = vmul.f32 0.5, %v1205
        %v1207 = vsub.f32 1.5, %v1206
        %v1208 = vmul.f32 %v1203, %v1207
        %vm1209 = vweird.f32 %v1202
        %vm1210 = vweird.f32 %v1203
        %vm1211 = vmor %vm1209, %vm1210
        %v1212 = vsel %vm1211, %v1203, %v1208
        %v1213 = vmul.f32 %v1196, %v1212
        %v1215 = vperm.slane %v1190, 0
        %v1217 = vmul.f32 %v1213, %v1215
        %v1219 = vperm.slane %v1191, 0
        %v1221 = vadd.f32 %v1217, %v1219
        %1222 = vst.msk [vmem:[%s686] sm:$0xff] %vm1016, %v1221
        %s1223 = sand.u32 %s404, 1
        %s1224 = scalar_lea.sflag [#allocation4], %s1223
        %s1225 = sand.u32 %s404, 1
        %s1226 = smul.addr %s1225, 8
        %s1227 = scalar_lea.vmem [#allocation11], %s1226
        // Predicated region
        $region101: #{tpu_custom_call.1} parent=79 // pred_check
          %p1228 = pneg %p414
        $region102: #{tpu_custom_call.1} parent=79 // pred_check_branch
          %1230 = sbr.rel (%p1228) target = $region104
        $region103: #{tpu_custom_call.1} parent=79 // pred_region
          %1232 = vsyncadd %s1224, 0
          %s1233 = sadd.s32 %s41, %s40
          %s1234 = smul.addr %s1233, 8
          %s1235 = scalar_lea.hbm %s15, %s1234
          %s1237 = sshll.u32 %s1227, 4
          %s1238 = int_to_ptr.vmem [resolvable:$true] %s1237
          %s1239 = sshll.u32 %s1235, 4
          %s1240 = int_to_ptr.hbm [resolvable:$true] %s1239
          %1242 = dma.vmem_to_hbm [thread:$0]  %s1238, 128, %s1240, %s1224
        $region104: #{tpu_custom_call.1} parent=79 // pred_fallthru
          _
      $region80: #{tpu_custom_call.1} parent=5 // pred_fallthru
        _
      %p1243 = scmp.le.s32.totalorder 2, %s31
      // Predicated region
      $region105: #{tpu_custom_call.1} parent=5 // pred_check
        %p1244 = pneg %p1243
      $region106: #{tpu_custom_call.1} parent=5 // pred_check_branch
        %1246 = sbr.rel (%p1244) target = $region108
      $region107: #{tpu_custom_call.1} parent=5 // pred_region
        %s1247 = ssub.s32 %s31, 2
        // Predicated region
        $region109: #{tpu_custom_call.1} parent=107 // pred_check
          %p1248 = pneg %p420
        $region110: #{tpu_custom_call.1} parent=107 // pred_check_branch
          %1250 = sbr.rel (%p1248) target = $region112
        $region111: #{tpu_custom_call.1} parent=107 // pred_region
          %s1251 = sand.u32 %s405, 1
          %s1252 = scalar_lea.sflag [#allocation4], %s1251
          %s1253 = sand.u32 %s405, 1
          %s1254 = smul.addr %s1253, 8
          %s1255 = scalar_lea.vmem [#allocation11], %s1254
          %1257 = dma.done %s1252, 128
        $region112: #{tpu_custom_call.1} parent=107 // pred_fallthru
          _
      $region108: #{tpu_custom_call.1} parent=5 // pred_fallthru
        _
    $region6: #{tpu_custom_call.1} parent=1 // loop_footer
      %s35 = sadd.s32 1, %s31
    $region7: #{tpu_custom_call.1} parent=1 // loop_footer_branch
      %30 = sbr.rel target = $region3
    $region8: #{tpu_custom_call.1} parent=1 // loop_exit
      _
    %1258 = vsyncpa [#allocation3], 1
    %s1259 = scalar_lea.sflag [#allocation3], 1
    %1260 = vsyncpa %s1259, 1
    %1261 = vsyncpa [#allocation6], 1
    %s1262 = scalar_lea.sflag [#allocation6], 1
    %1263 = vsyncpa %s1262, 1
    %1264 = vsyncpa [#allocation9], 1
    %1265 = vsyncpa [#allocation4], 1
    %s1266 = scalar_lea.sflag [#allocation4], 1
    %1267 = vsyncpa %s1266, 1

</llo_original>
